<compile_context>
chip_gen: v7x
topology: tpu7x:2x2x1
jax: 0.10.0
libtpu: 0.0.40
codegen_flags: <defaults>
</compile_context>

<pallas_src>
import math
from functools import partial

import jax
import jax.numpy as jnp
from jax.experimental import pallas as pl
from jax.experimental.pallas import tpu as pltpu

PARTS = 8            # parts_size in the reference forward
RAY_DIM = 3          # mlp_ray1 input_dim
_LANE = 128


def _round_up(x, m):
    return (x + m - 1) // m * m


# ----------------------------------------------------------------------------
# Kernel
# ----------------------------------------------------------------------------
def _spatial_attention_kernel(
    x_ref,                                                   # (TB, PARTS, RAY_DIM)
    w1_ref, b1_ref, w2_ref, b2_ref, w3_ref, b3_ref,          # mlp_ray1
    w4a1_ref, b4a1_ref,                                      # fused mlp_ray2[0] | attention[0]
    w5_ref, b5_ref,                                          # mlp_ray2[1]
    wa2_ref, ba2_ref, wa3r_ref, ba3_ref,                     # attention[1], attention[2] (row form)
    wv_ref, bv_ref,                                          # mlp_values (lane-padded)
    out_ref,                                                 # (TB, N_OUT)
):
    dot = partial(jnp.dot, preferred_element_type=jnp.float32)
    relu = lambda v: jnp.maximum(v, 0.0)

    tb = x_ref.shape[0]
    m = tb * PARTS

    # Flatten rays into the row (sublane) axis: tile-aligned, layout-free.
    x = x_ref[...].astype(jnp.float32).reshape(m, RAY_DIM)   # (M, 3)

    # mlp_ray1 layer 1 (K=3): VPU broadcast-FMAs instead of a 3/256-utilized MXU pass.
    h = (x[:, 0:1] * w1_ref[0:1, :]
         + x[:, 1:2] * w1_ref[1:2, :]
         + x[:, 2:3] * w1_ref[2:3, :]
         + b1_ref[...])
    h = relu(h)                                              # (M, 128)

    # mlp_ray1 layers 2, 3 (MXU).
    h = relu(dot(h, w2_ref[...]) + b2_ref[...])              # (M, 80)
    m1 = relu(dot(h, w3_ref[...]) + b3_ref[...])             # (M, 48)

    # Fused first layers of mlp_ray2 and attention: single (48, 64) matmul.
    z = relu(dot(m1, w4a1_ref[...]) + b4a1_ref[...])         # (M, 64)
    f = z[:, :32]                                            # mlp_ray2 branch (post-ReLU)
    a = z[:, 32:64]                                          # attention branch (post-ReLU)

    # mlp_ray2 layer 2 (no activation) -> per-ray features.
    feats = dot(f, w5_ref[...]) + b5_ref[...]                # (M, 16)

    # attention layer 2 (+ReLU); layer 3 (12->1) on VPU/XLU (single useful lane).
    a = relu(dot(a, wa2_ref[...]) + ba2_ref[...])            # (M, 12)
    scores = jnp.sum(a * wa3r_ref[...], axis=-1, keepdims=True) + ba3_ref[...]   # (M, 1)

    # Softmax over rays + weighted pooling; rays sit on the sublane axis.
    scores3 = scores.reshape(tb, PARTS, 1)                   # tile-aligned reshape
    feats3 = feats.reshape(tb, PARTS, 16)
    smax = jnp.max(scores3, axis=1, keepdims=True)           # (TB, 1, 1)
    e = jnp.exp(scores3 - smax)                              # (TB, 8, 1)
    attn = e / jnp.sum(e, axis=1, keepdims=True)             # (TB, 8, 1)
    weighted = jnp.sum(attn * feats3, axis=1)                # (TB, 16)

    # Value head (wv pre-padded to a lane-dense N_OUT); lane-dense store.
    q = dot(weighted, wv_ref[...]) + bv_ref[...]             # (TB, N_OUT)
    out_ref[...] = q.astype(out_ref.dtype)


# ----------------------------------------------------------------------------
# Wrapper
# ----------------------------------------------------------------------------
def _choose_batch_tile(batch, max_tile=512):
    # At least two grid steps for large batches (keeps v7x's 2nd TC busy) and a
    # cap so f32 activations (~TB*4 KiB each, ~8-10 MiB peak at TB=512) stay
    # comfortably inside v7x's 64 MiB VMEM / the 32 MiB scoped limit below.
    half = _round_up(max(pl.cdiv(batch, 2), 8), 8)
    return min(max_tile, half)


def spatial_attention_model2(state, params, n_actions):
    """state: (B, PARTS, RAY_DIM) float array.  Returns Q-values (B, n_actions) f32."""
    B = state.shape[0]
    assert state.shape[1:] == (PARTS, RAY_DIM)
    state = state.astype(jnp.float32)

    (w1, b1, w2, b2, w3, b3, w4, b4, w5, b5,
     wa1, ba1, wa2, ba2, wa3, ba3, wv, bv) = [p.astype(jnp.float32) for p in params]

    # Fuse the two consumers of mlp_out1 into one (48, 64) matmul.
    w4a1 = jnp.concatenate([w4, wa1], axis=1)                # (48, 64)
    b4a1 = jnp.concatenate([b4, ba1], axis=1)                # (1, 64)
    wa3_row = wa3.T                                          # (1, 12)

    # Lane-dense output: pad the value head to a multiple of 128 lanes.
    n_out = _round_up(max(n_actions, 1), _LANE)
    wv_pad = jnp.zeros((wv.shape[0], n_out), jnp.float32).at[:, :n_actions].set(wv)
    bv_pad = jnp.zeros((1, n_out), jnp.float32).at[:, :n_actions].set(bv)

    packed = [w1, b1, w2, b2, w3, b3, w4a1, b4a1,
              w5, b5, wa2, ba2, wa3_row, ba3, wv_pad, bv_pad]

    # Batch tiling (+ zero padding so the tile divides the batch exactly).
    tb = _choose_batch_tile(B)
    b_pad = _round_up(B, tb)
    if b_pad != B:
        state = jnp.pad(state, ((0, b_pad - B), (0, 0), (0, 0)))

    in_specs = [pl.BlockSpec((tb, PARTS, RAY_DIM), lambda i: (i, 0, 0))]
    # Grid-invariant weights: full-shape blocks, constant index map (DMA'd once).
    in_specs += [pl.BlockSpec(p.shape, lambda i: (0, 0)) for p in packed]
    out_spec = pl.BlockSpec((tb, n_out), lambda i: (i, 0))

    out = pl.pallas_call(
        _spatial_attention_kernel,
        out_shape=jax.ShapeDtypeStruct((b_pad, n_out), jnp.float32),
        grid_spec=pltpu.PrefetchScalarGridSpec(
            num_scalar_prefetch=0,
            grid=(b_pad // tb,),
            in_specs=in_specs,
            out_specs=out_spec,
        ),
        compiler_params=pltpu.CompilerParams(
            dimension_semantics=("parallel",),
            vmem_limit_bytes=32 * 1024 * 1024,   # > v5e's 16 MiB default, safe on v7x
        ),
    )(state, *packed)

    return out[:B, :n_actions]


# ----------------------------------------------------------------------------
# Deterministic parameter init (PyTorch nn.Linear default: U(-1/sqrt(in), +))
# ----------------------------------------------------------------------------
def init_linear(key, in_dim, out_dim):
    kw, kb = jax.random.split(key)
    bound = 1.0 / math.sqrt(in_dim)
    w = jax.random.uniform(kw, (in_dim, out_dim), jnp.float32, -bound, bound)
    b = jax.random.uniform(kb, (1, out_dim), jnp.float32, -bound, bound)
    return w, b


def init_params(key, n_actions):
    layer_dims = [
        # mlp_ray1
        (3, 128), (128, 80), (80, 48),
        # mlp_ray2
        (48, 32), (32, 16),
        # attention
        (48, 32), (32, 12), (12, 1),
        # mlp_values
        (16, n_actions),
    ]
    keys = jax.random.split(key, len(layer_dims))
    params = []
    for k, (i, o) in zip(keys, layer_dims):
        w, b = init_linear(k, i, o)
        params += [w, b]
    return params


# ----------------------------------------------------------------------------
# Pure-JAX reference (for correctness check)
# ----------------------------------------------------------------------------
def reference_forward(state, params, n_actions):
    (w1, b1, w2, b2, w3, b3, w4, b4, w5, b5,
     wa1, ba1, wa2, ba2, wa3, ba3, wv, bv) = params
    relu = lambda v: jnp.maximum(v, 0.0)
    x = state.astype(jnp.float32)
    h = relu(x @ w1 + b1[0])
    h = relu(h @ w2 + b2[0])
    m1 = relu(h @ w3 + b3[0])                       # (B, 8, 48)
    f = relu(m1 @ w4 + b4[0])
    feats = f @ w5 + b5[0]                          # (B, 8, 16)
    a = relu(m1 @ wa1 + ba1[0])
    a = relu(a @ wa2 + ba2[0])
    scores = (a @ wa3 + ba3[0])[..., 0]             # (B, 8)
    attn = jax.nn.softmax(scores, axis=1)[..., None]
    weighted = jnp.sum(attn * feats, axis=1)        # (B, 16)
    return weighted @ wv + bv[0]                    # (B, n_actions)


# TODO(synk): pfrl.action_value.DiscreteActionValue is just a container around
# the Q-values; the kernel returns the raw Q-value tensor.

if __name__ == "__main__":
    n_actions = 4

    key = jax.random.PRNGKey(0)
    k_params, k_state = jax.random.split(key)
    params = init_params(k_params, n_actions)

    # batch=2: single tile; batch=37: exercises multi-step grid + batch padding.
    for batch in (2, 37):
        k_state, k = jax.random.split(k_state)
        state = jax.random.normal(k, (batch, PARTS, RAY_DIM), jnp.float32)

        q = jax.block_until_ready(spatial_attention_model2(state, params, n_actions))
        q_ref = reference_forward(state, params, n_actions)

        assert q.shape == (batch, n_actions)
        assert jnp.allclose(q, q_ref, atol=1e-4, rtol=1e-3), (q, q_ref)

    print("KERNEL_OK")
</pallas_src>

<mosaic_0001>
module attributes {stable_mosaic.version = 11 : i64} {
  func.func @_spatial_attention_kernel(%arg0: i32, %arg1: memref<8x8x3xf32, #tpu.memory_space<vmem>>, %arg2: memref<3x128xf32, #tpu.memory_space<vmem>>, %arg3: memref<1x128xf32, #tpu.memory_space<vmem>>, %arg4: memref<128x80xf32, #tpu.memory_space<vmem>>, %arg5: memref<1x80xf32, #tpu.memory_space<vmem>>, %arg6: memref<80x48xf32, #tpu.memory_space<vmem>>, %arg7: memref<1x48xf32, #tpu.memory_space<vmem>>, %arg8: memref<48x64xf32, #tpu.memory_space<vmem>>, %arg9: memref<1x64xf32, #tpu.memory_space<vmem>>, %arg10: memref<32x16xf32, #tpu.memory_space<vmem>>, %arg11: memref<1x16xf32, #tpu.memory_space<vmem>>, %arg12: memref<32x12xf32, #tpu.memory_space<vmem>>, %arg13: memref<1x12xf32, #tpu.memory_space<vmem>>, %arg14: memref<1x12xf32, #tpu.memory_space<vmem>>, %arg15: memref<1x1xf32, #tpu.memory_space<vmem>>, %arg16: memref<16x128xf32, #tpu.memory_space<vmem>>, %arg17: memref<1x128xf32, #tpu.memory_space<vmem>>, %arg18: memref<8x128xf32, #tpu.memory_space<vmem>>) attributes {dimension_semantics = [#tpu.dimension_semantics<parallel>], iteration_bounds = array<i64: 1>, scalar_prefetch = 0 : i64, scratch_operands = 0 : i64, tpu.core_type = #tpu.core_type<tc>, window_params = [{transform_indices = @transform_0, window_bounds = array<i64: 8, 8, 3>}, {pipeline_mode = #tpu.pipeline_mode<synchronous>, transform_indices = @transform_1, window_bounds = array<i64: 3, 128>}, {pipeline_mode = #tpu.pipeline_mode<synchronous>, transform_indices = @transform_2, window_bounds = array<i64: 1, 128>}, {pipeline_mode = #tpu.pipeline_mode<synchronous>, transform_indices = @transform_3, window_bounds = array<i64: 128, 80>}, {pipeline_mode = #tpu.pipeline_mode<synchronous>, transform_indices = @transform_4, window_bounds = array<i64: 1, 80>}, {pipeline_mode = #tpu.pipeline_mode<synchronous>, transform_indices = @transform_5, window_bounds = array<i64: 80, 48>}, {pipeline_mode = #tpu.pipeline_mode<synchronous>, transform_indices = @transform_6, window_bounds = array<i64: 1, 48>}, {pipeline_mode = #tpu.pipeline_mode<synchronous>, transform_indices = @transform_7, window_bounds = array<i64: 48, 64>}, {pipeline_mode = #tpu.pipeline_mode<synchronous>, transform_indices = @transform_8, window_bounds = array<i64: 1, 64>}, {pipeline_mode = #tpu.pipeline_mode<synchronous>, transform_indices = @transform_9, window_bounds = array<i64: 32, 16>}, {pipeline_mode = #tpu.pipeline_mode<synchronous>, transform_indices = @transform_10, window_bounds = array<i64: 1, 16>}, {pipeline_mode = #tpu.pipeline_mode<synchronous>, transform_indices = @transform_11, window_bounds = array<i64: 32, 12>}, {pipeline_mode = #tpu.pipeline_mode<synchronous>, transform_indices = @transform_12, window_bounds = array<i64: 1, 12>}, {pipeline_mode = #tpu.pipeline_mode<synchronous>, transform_indices = @transform_13, window_bounds = array<i64: 1, 12>}, {pipeline_mode = #tpu.pipeline_mode<synchronous>, transform_indices = @transform_14, window_bounds = array<i64: 1, 1>}, {pipeline_mode = #tpu.pipeline_mode<synchronous>, transform_indices = @transform_15, window_bounds = array<i64: 16, 128>}, {pipeline_mode = #tpu.pipeline_mode<synchronous>, transform_indices = @transform_16, window_bounds = array<i64: 1, 128>}, {transform_indices = @transform_17, window_bounds = array<i64: 8, 128>}]} {
    %c0 = arith.constant 0 : index
    %c0_0 = arith.constant 0 : index
    %c0_1 = arith.constant 0 : index
    %0 = vector.load %arg1[%c0, %c0_0, %c0_1] : memref<8x8x3xf32, #tpu.memory_space<vmem>>, vector<8x8x3xf32>
    %1 = vector.shape_cast %0 : vector<8x8x3xf32> to vector<64x3xf32>
    %2 = vector.extract_strided_slice %1 {offsets = [0, 0], sizes = [64, 1], strides = [1, 1]} : vector<64x3xf32> to vector<64x1xf32>
    %c0_2 = arith.constant 0 : index
    %c0_3 = arith.constant 0 : index
    %3 = vector.load %arg2[%c0_2, %c0_3] : memref<3x128xf32, #tpu.memory_space<vmem>>, vector<1x128xf32>
    %4 = vector.broadcast %2 : vector<64x1xf32> to vector<64x128xf32>
    %5 = vector.broadcast %3 : vector<1x128xf32> to vector<64x128xf32>
    %6 = arith.mulf %4, %5 : vector<64x128xf32>
    %7 = vector.extract_strided_slice %1 {offsets = [0, 1], sizes = [64, 1], strides = [1, 1]} : vector<64x3xf32> to vector<64x1xf32>
    %c1 = arith.constant 1 : index
    %c0_4 = arith.constant 0 : index
    %8 = vector.load %arg2[%c1, %c0_4] : memref<3x128xf32, #tpu.memory_space<vmem>>, vector<1x128xf32>
    %9 = vector.broadcast %7 : vector<64x1xf32> to vector<64x128xf32>
    %10 = vector.broadcast %8 : vector<1x128xf32> to vector<64x128xf32>
    %11 = arith.mulf %9, %10 : vector<64x128xf32>
    %12 = arith.addf %6, %11 : vector<64x128xf32>
    %13 = vector.extract_strided_slice %1 {offsets = [0, 2], sizes = [64, 1], strides = [1, 1]} : vector<64x3xf32> to vector<64x1xf32>
    %c2 = arith.constant 2 : index
    %c0_5 = arith.constant 0 : index
    %14 = vector.load %arg2[%c2, %c0_5] : memref<3x128xf32, #tpu.memory_space<vmem>>, vector<1x128xf32>
    %15 = vector.broadcast %13 : vector<64x1xf32> to vector<64x128xf32>
    %16 = vector.broadcast %14 : vector<1x128xf32> to vector<64x128xf32>
    %17 = arith.mulf %15, %16 : vector<64x128xf32>
    %18 = arith.addf %12, %17 : vector<64x128xf32>
    %c0_6 = arith.constant 0 : index
    %c0_7 = arith.constant 0 : index
    %19 = vector.load %arg3[%c0_6, %c0_7] : memref<1x128xf32, #tpu.memory_space<vmem>>, vector<1x128xf32>
    %20 = vector.broadcast %19 : vector<1x128xf32> to vector<64x128xf32>
    %21 = arith.addf %18, %20 : vector<64x128xf32>
    %cst = arith.constant 0.000000e+00 : f32
    %22 = vector.broadcast %cst : f32 to vector<64x128xf32>
    %23 = arith.maximumf %21, %22 : vector<64x128xf32>
    %c0_8 = arith.constant 0 : index
    %c0_9 = arith.constant 0 : index
    %24 = vector.load %arg4[%c0_8, %c0_9] : memref<128x80xf32, #tpu.memory_space<vmem>>, vector<128x80xf32>
    %cst_10 = arith.constant dense<0.000000e+00> : vector<64x80xf32>
    %25 = tpu.matmul %23, %24, %cst_10 {dimension_numbers = #tpu.dot_dimension_numbers<[1], [0], [0], [1], [0, 0, 1, 1], [], []>} : vector<64x128xf32>, vector<128x80xf32>, vector<64x80xf32> -> vector<64x80xf32>
    %c0_11 = arith.constant 0 : index
    %c0_12 = arith.constant 0 : index
    %26 = vector.load %arg5[%c0_11, %c0_12] : memref<1x80xf32, #tpu.memory_space<vmem>>, vector<1x80xf32>
    %27 = vector.broadcast %26 : vector<1x80xf32> to vector<64x80xf32>
    %28 = arith.addf %25, %27 : vector<64x80xf32>
    %cst_13 = arith.constant 0.000000e+00 : f32
    %29 = vector.broadcast %cst_13 : f32 to vector<64x80xf32>
    %30 = arith.maximumf %28, %29 : vector<64x80xf32>
    %c0_14 = arith.constant 0 : index
    %c0_15 = arith.constant 0 : index
    %31 = vector.load %arg6[%c0_14, %c0_15] : memref<80x48xf32, #tpu.memory_space<vmem>>, vector<80x48xf32>
    %cst_16 = arith.constant dense<0.000000e+00> : vector<64x48xf32>
    %32 = tpu.matmul %30, %31, %cst_16 {dimension_numbers = #tpu.dot_dimension_numbers<[1], [0], [0], [1], [0, 0, 1, 1], [], []>} : vector<64x80xf32>, vector<80x48xf32>, vector<64x48xf32> -> vector<64x48xf32>
    %c0_17 = arith.constant 0 : index
    %c0_18 = arith.constant 0 : index
    %33 = vector.load %arg7[%c0_17, %c0_18] : memref<1x48xf32, #tpu.memory_space<vmem>>, vector<1x48xf32>
    %34 = vector.broadcast %33 : vector<1x48xf32> to vector<64x48xf32>
    %35 = arith.addf %32, %34 : vector<64x48xf32>
    %cst_19 = arith.constant 0.000000e+00 : f32
    %36 = vector.broadcast %cst_19 : f32 to vector<64x48xf32>
    %37 = arith.maximumf %35, %36 : vector<64x48xf32>
    %c0_20 = arith.constant 0 : index
    %c0_21 = arith.constant 0 : index
    %38 = vector.load %arg8[%c0_20, %c0_21] : memref<48x64xf32, #tpu.memory_space<vmem>>, vector<48x64xf32>
    %cst_22 = arith.constant dense<0.000000e+00> : vector<64x64xf32>
    %39 = tpu.matmul %37, %38, %cst_22 {dimension_numbers = #tpu.dot_dimension_numbers<[1], [0], [0], [1], [0, 0, 1, 1], [], []>} : vector<64x48xf32>, vector<48x64xf32>, vector<64x64xf32> -> vector<64x64xf32>
    %c0_23 = arith.constant 0 : index
    %c0_24 = arith.constant 0 : index
    %40 = vector.load %arg9[%c0_23, %c0_24] : memref<1x64xf32, #tpu.memory_space<vmem>>, vector<1x64xf32>
    %41 = vector.broadcast %40 : vector<1x64xf32> to vector<64x64xf32>
    %42 = arith.addf %39, %41 : vector<64x64xf32>
    %cst_25 = arith.constant 0.000000e+00 : f32
    %43 = vector.broadcast %cst_25 : f32 to vector<64x64xf32>
    %44 = arith.maximumf %42, %43 : vector<64x64xf32>
    %45 = vector.extract_strided_slice %44 {offsets = [0, 0], sizes = [64, 32], strides = [1, 1]} : vector<64x64xf32> to vector<64x32xf32>
    %46 = vector.extract_strided_slice %44 {offsets = [0, 32], sizes = [64, 32], strides = [1, 1]} : vector<64x64xf32> to vector<64x32xf32>
    %c0_26 = arith.constant 0 : index
    %c0_27 = arith.constant 0 : index
    %47 = vector.load %arg10[%c0_26, %c0_27] : memref<32x16xf32, #tpu.memory_space<vmem>>, vector<32x16xf32>
    %cst_28 = arith.constant dense<0.000000e+00> : vector<64x16xf32>
    %48 = tpu.matmul %45, %47, %cst_28 {dimension_numbers = #tpu.dot_dimension_numbers<[1], [0], [0], [1], [0, 0, 1, 1], [], []>} : vector<64x32xf32>, vector<32x16xf32>, vector<64x16xf32> -> vector<64x16xf32>
    %c0_29 = arith.constant 0 : index
    %c0_30 = arith.constant 0 : index
    %49 = vector.load %arg11[%c0_29, %c0_30] : memref<1x16xf32, #tpu.memory_space<vmem>>, vector<1x16xf32>
    %50 = vector.broadcast %49 : vector<1x16xf32> to vector<64x16xf32>
    %51 = arith.addf %48, %50 : vector<64x16xf32>
    %c0_31 = arith.constant 0 : index
    %c0_32 = arith.constant 0 : index
    %52 = vector.load %arg12[%c0_31, %c0_32] : memref<32x12xf32, #tpu.memory_space<vmem>>, vector<32x12xf32>
    %cst_33 = arith.constant dense<0.000000e+00> : vector<64x12xf32>
    %53 = tpu.matmul %46, %52, %cst_33 {dimension_numbers = #tpu.dot_dimension_numbers<[1], [0], [0], [1], [0, 0, 1, 1], [], []>} : vector<64x32xf32>, vector<32x12xf32>, vector<64x12xf32> -> vector<64x12xf32>
    %c0_34 = arith.constant 0 : index
    %c0_35 = arith.constant 0 : index
    %54 = vector.load %arg13[%c0_34, %c0_35] : memref<1x12xf32, #tpu.memory_space<vmem>>, vector<1x12xf32>
    %55 = vector.broadcast %54 : vector<1x12xf32> to vector<64x12xf32>
    %56 = arith.addf %53, %55 : vector<64x12xf32>
    %cst_36 = arith.constant 0.000000e+00 : f32
    %57 = vector.broadcast %cst_36 : f32 to vector<64x12xf32>
    %58 = arith.maximumf %56, %57 : vector<64x12xf32>
    %c0_37 = arith.constant 0 : index
    %c0_38 = arith.constant 0 : index
    %59 = vector.load %arg14[%c0_37, %c0_38] : memref<1x12xf32, #tpu.memory_space<vmem>>, vector<1x12xf32>
    %60 = vector.broadcast %59 : vector<1x12xf32> to vector<64x12xf32>
    %61 = arith.mulf %58, %60 : vector<64x12xf32>
    %cst_39 = arith.constant dense<0.000000e+00> : vector<64xf32>
    %62 = vector.multi_reduction <add>, %61, %cst_39 [1] : vector<64x12xf32> to vector<64xf32>
    %63 = vector.shape_cast %62 : vector<64xf32> to vector<64x1xf32>
    %c0_40 = arith.constant 0 : index
    %c0_41 = arith.constant 0 : index
    %64 = vector.load %arg15[%c0_40, %c0_41] : memref<1x1xf32, #tpu.memory_space<vmem>>, vector<1x1xf32>
    %65 = vector.broadcast %64 : vector<1x1xf32> to vector<64x1xf32>
    %66 = arith.addf %63, %65 : vector<64x1xf32>
    %67 = vector.shape_cast %66 : vector<64x1xf32> to vector<8x8x1xf32>
    %68 = vector.shape_cast %51 : vector<64x16xf32> to vector<8x8x16xf32>
    %cst_42 = arith.constant dense<0xFF800000> : vector<8x1xf32>
    %69 = vector.multi_reduction <maximumf>, %67, %cst_42 [1] : vector<8x8x1xf32> to vector<8x1xf32>
    %70 = vector.shape_cast %69 : vector<8x1xf32> to vector<8x1x1xf32>
    %71 = vector.broadcast %70 : vector<8x1x1xf32> to vector<8x8x1xf32>
    %72 = arith.subf %67, %71 : vector<8x8x1xf32>
    %73 = math.exp %72 : vector<8x8x1xf32>
    %cst_43 = arith.constant dense<0.000000e+00> : vector<8x1xf32>
    %74 = vector.multi_reduction <add>, %73, %cst_43 [1] : vector<8x8x1xf32> to vector<8x1xf32>
    %75 = vector.shape_cast %74 : vector<8x1xf32> to vector<8x1x1xf32>
    %76 = vector.broadcast %75 : vector<8x1x1xf32> to vector<8x8x1xf32>
    %77 = arith.divf %73, %76 : vector<8x8x1xf32>
    %78 = vector.broadcast %77 : vector<8x8x1xf32> to vector<8x8x16xf32>
    %79 = arith.mulf %78, %68 : vector<8x8x16xf32>
    %cst_44 = arith.constant dense<0.000000e+00> : vector<8x16xf32>
    %80 = vector.multi_reduction <add>, %79, %cst_44 [1] : vector<8x8x16xf32> to vector<8x16xf32>
    %c0_45 = arith.constant 0 : index
    %c0_46 = arith.constant 0 : index
    %81 = vector.load %arg16[%c0_45, %c0_46] : memref<16x128xf32, #tpu.memory_space<vmem>>, vector<16x128xf32>
    %cst_47 = arith.constant dense<0.000000e+00> : vector<8x128xf32>
    %82 = tpu.matmul %80, %81, %cst_47 {dimension_numbers = #tpu.dot_dimension_numbers<[1], [0], [0], [1], [0, 0, 1, 1], [], []>} : vector<8x16xf32>, vector<16x128xf32>, vector<8x128xf32> -> vector<8x128xf32>
    %c0_48 = arith.constant 0 : index
    %c0_49 = arith.constant 0 : index
    %83 = vector.load %arg17[%c0_48, %c0_49] : memref<1x128xf32, #tpu.memory_space<vmem>>, vector<1x128xf32>
    %84 = vector.broadcast %83 : vector<1x128xf32> to vector<8x128xf32>
    %85 = arith.addf %82, %84 : vector<8x128xf32>
    %c0_50 = arith.constant 0 : index
    %c0_51 = arith.constant 0 : index
    %86 = vector.load %arg18[%c0_50, %c0_51] : memref<8x128xf32, #tpu.memory_space<vmem>>, vector<8x128xf32>
    tpu.vector_store %arg18[%c0_50, %c0_51], %85 {strides = array<i32>} : memref<8x128xf32, #tpu.memory_space<vmem>>, vector<8x128xf32>,
    return
  }
  func.func @transform_0(%arg0: i32) -> (i32, i32, i32) {
    %c0_i32 = arith.constant 0 : i32
    %c0_i32_0 = arith.constant 0 : i32
    %c0_i32_1 = arith.constant 0 : i32
    return %arg0, %c0_i32, %c0_i32_0 : i32, i32, i32
  }
  func.func @transform_1(%arg0: i32) -> (i32, i32) {
    %c0_i32 = arith.constant 0 : i32
    %c0_i32_0 = arith.constant 0 : i32
    %c0_i32_1 = arith.constant 0 : i32
    return %c0_i32, %c0_i32_0 : i32, i32
  }
  func.func @transform_2(%arg0: i32) -> (i32, i32) {
    %c0_i32 = arith.constant 0 : i32
    %c0_i32_0 = arith.constant 0 : i32
    %c0_i32_1 = arith.constant 0 : i32
    return %c0_i32, %c0_i32_0 : i32, i32
  }
  func.func @transform_3(%arg0: i32) -> (i32, i32) {
    %c0_i32 = arith.constant 0 : i32
    %c0_i32_0 = arith.constant 0 : i32
    %c0_i32_1 = arith.constant 0 : i32
    return %c0_i32, %c0_i32_0 : i32, i32
  }
  func.func @transform_4(%arg0: i32) -> (i32, i32) {
    %c0_i32 = arith.constant 0 : i32
    %c0_i32_0 = arith.constant 0 : i32
    %c0_i32_1 = arith.constant 0 : i32
    return %c0_i32, %c0_i32_0 : i32, i32
  }
  func.func @transform_5(%arg0: i32) -> (i32, i32) {
    %c0_i32 = arith.constant 0 : i32
    %c0_i32_0 = arith.constant 0 : i32
    %c0_i32_1 = arith.constant 0 : i32
    return %c0_i32, %c0_i32_0 : i32, i32
  }
  func.func @transform_6(%arg0: i32) -> (i32, i32) {
    %c0_i32 = arith.constant 0 : i32
    %c0_i32_0 = arith.constant 0 : i32
    %c0_i32_1 = arith.constant 0 : i32
    return %c0_i32, %c0_i32_0 : i32, i32
  }
  func.func @transform_7(%arg0: i32) -> (i32, i32) {
    %c0_i32 = arith.constant 0 : i32
    %c0_i32_0 = arith.constant 0 : i32
    %c0_i32_1 = arith.constant 0 : i32
    return %c0_i32, %c0_i32_0 : i32, i32
  }
  func.func @transform_8(%arg0: i32) -> (i32, i32) {
    %c0_i32 = arith.constant 0 : i32
    %c0_i32_0 = arith.constant 0 : i32
    %c0_i32_1 = arith.constant 0 : i32
    return %c0_i32, %c0_i32_0 : i32, i32
  }
  func.func @transform_9(%arg0: i32) -> (i32, i32) {
    %c0_i32 = arith.constant 0 : i32
    %c0_i32_0 = arith.constant 0 : i32
    %c0_i32_1 = arith.constant 0 : i32
    return %c0_i32, %c0_i32_0 : i32, i32
  }
  func.func @transform_10(%arg0: i32) -> (i32, i32) {
    %c0_i32 = arith.constant 0 : i32
    %c0_i32_0 = arith.constant 0 : i32
    %c0_i32_1 = arith.constant 0 : i32
    return %c0_i32, %c0_i32_0 : i32, i32
  }
  func.func @transform_11(%arg0: i32) -> (i32, i32) {
    %c0_i32 = arith.constant 0 : i32
    %c0_i32_0 = arith.constant 0 : i32
    %c0_i32_1 = arith.constant 0 : i32
    return %c0_i32, %c0_i32_0 : i32, i32
  }
  func.func @transform_12(%arg0: i32) -> (i32, i32) {
    %c0_i32 = arith.constant 0 : i32
    %c0_i32_0 = arith.constant 0 : i32
    %c0_i32_1 = arith.constant 0 : i32
    return %c0_i32, %c0_i32_0 : i32, i32
  }
  func.func @transform_13(%arg0: i32) -> (i32, i32) {
    %c0_i32 = arith.constant 0 : i32
    %c0_i32_0 = arith.constant 0 : i32
    %c0_i32_1 = arith.constant 0 : i32
    return %c0_i32, %c0_i32_0 : i32, i32
  }
  func.func @transform_14(%arg0: i32) -> (i32, i32) {
    %c0_i32 = arith.constant 0 : i32
    %c0_i32_0 = arith.constant 0 : i32
    %c0_i32_1 = arith.constant 0 : i32
    return %c0_i32, %c0_i32_0 : i32, i32
  }
  func.func @transform_15(%arg0: i32) -> (i32, i32) {
    %c0_i32 = arith.constant 0 : i32
    %c0_i32_0 = arith.constant 0 : i32
    %c0_i32_1 = arith.constant 0 : i32
    return %c0_i32, %c0_i32_0 : i32, i32
  }
  func.func @transform_16(%arg0: i32) -> (i32, i32) {
    %c0_i32 = arith.constant 0 : i32
    %c0_i32_0 = arith.constant 0 : i32
    %c0_i32_1 = arith.constant 0 : i32
    return %c0_i32, %c0_i32_0 : i32, i32
  }
  func.func @transform_17(%arg0: i32) -> (i32, i32) {
    %c0_i32 = arith.constant 0 : i32
    %c0_i32_0 = arith.constant 0 : i32
    return %arg0, %c0_i32 : i32, i32
  }
}

</mosaic_0001>

<llo_original>
// kernel: tpu_custom_call.1
$region0: #{tpu_custom_call.1}
  #allocation0 [shape = 'u32[]', space=smem, size = 0x4, offset = 0x4, fixed_abs, tag = 'smem constant byte address 0x4 - core index']
  #allocation1 [shape = 'u32[144,128]{1,0:T(1,128)}', space=vmem, size = 0x12000, scoped, tag = 'internal scratch']
  #allocation2 [shape = 'f32[1,1]{1,0:T(1,128)S(1)}', space=vmem, size = 0x200, scoped, tag = 'scoped memory for tpu_custom_call.1']
  %s0 = inlined_call_operand.vmem [shape: f32[8,8,3], index: 0, kind: input, shape index: {}]
  %s1 = inlined_call_operand.vmem [shape: f32[3,128], index: 1, kind: input, shape index: {}]
  %s2 = inlined_call_operand.vmem [shape: f32[1,128], index: 2, kind: input, shape index: {}]
  %s3 = inlined_call_operand.vmem [shape: f32[128,80], index: 3, kind: input, shape index: {}]
  %s4 = inlined_call_operand.vmem [shape: f32[1,80], index: 4, kind: input, shape index: {}]
  %s5 = inlined_call_operand.vmem [shape: f32[80,48], index: 5, kind: input, shape index: {}]
  %s6 = inlined_call_operand.vmem [shape: f32[1,48], index: 6, kind: input, shape index: {}]
  %s7 = inlined_call_operand.vmem [shape: f32[48,64], index: 7, kind: input, shape index: {}]
  %s8 = inlined_call_operand.vmem [shape: f32[1,64], index: 8, kind: input, shape index: {}]
  %s9 = inlined_call_operand.vmem [shape: f32[32,16], index: 9, kind: input, shape index: {}]
  %s10 = inlined_call_operand.vmem [shape: f32[1,16], index: 10, kind: input, shape index: {}]
  %s11 = inlined_call_operand.vmem [shape: f32[32,12], index: 11, kind: input, shape index: {}]
  %s12 = inlined_call_operand.vmem [shape: f32[1,12], index: 12, kind: input, shape index: {}]
  %s13 = inlined_call_operand.vmem [shape: f32[1,12], index: 13, kind: input, shape index: {}]
  %s14 = inlined_call_operand.<no memory space> [shape: f32[1,1], index: 14, kind: input, shape index: {}]
  %s15 = inlined_call_operand.vmem [shape: f32[16,128], index: 15, kind: input, shape index: {}]
  %s16 = inlined_call_operand.vmem [shape: f32[1,128], index: 16, kind: input, shape index: {}]
  %s17 = inlined_call_operand.hbm [shape: f32[8,128], index: 17, kind: output, shape index: {}]
  %s18 = sld [smem:[#allocation0]]
  $region78: #{tpu_custom_call.1} parent=0
    _
  %s20 = ssub.s32 1, %s18
  %s21 = scalar_select 0, %s20, %s18
  %v22 = vstv %s14
  %23 = vst [vmem:[#allocation2] sm:$0x1] %v22
  $region1: #{tpu_custom_call.1} parent=0
    #allocation3 [shape = 'u8[4096]{0}', space=vmem, size = 0x1000, scoped, tag = 'output window, operand 0, single buffered']
    #allocation4 [shape = 's32[1]{0}', space=sflag, size = 0x4, scoped, tag = 'scoped memory for tpu_custom_call.1']
    %24 = vsyncpa [#allocation4], 0
    // Predicated region
    $region2: #{tpu_custom_call.1} parent=1 // pred_check
      _
    $region3: #{tpu_custom_call.1} parent=1 // pred_check_branch
      %26 = sbr.rel (0) target = $region5
    $region4: #{tpu_custom_call.1} parent=1 // pred_region
      _
    $region5: #{tpu_custom_call.1} parent=1 // pred_fallthru
      _
    // Predicated region
    $region6: #{tpu_custom_call.1} parent=1 // pred_check
      _
    $region7: #{tpu_custom_call.1} parent=1 // pred_check_branch
      %28 = sbr.rel (0) target = $region9
    $region8: #{tpu_custom_call.1} parent=1 // pred_region
      _
    $region9: #{tpu_custom_call.1} parent=1 // pred_fallthru
      _
    // Predicated region
    $region10: #{tpu_custom_call.1} parent=1 // pred_check
      _
    $region11: #{tpu_custom_call.1} parent=1 // pred_check_branch
      %30 = sbr.rel (0) target = $region13
    $region12: #{tpu_custom_call.1} parent=1 // pred_region
      _
    $region13: #{tpu_custom_call.1} parent=1 // pred_fallthru
      _
    // Predicated region
    $region14: #{tpu_custom_call.1} parent=1 // pred_check
      _
    $region15: #{tpu_custom_call.1} parent=1 // pred_check_branch
      %32 = sbr.rel (0) target = $region17
    $region16: #{tpu_custom_call.1} parent=1 // pred_region
      _
    $region17: #{tpu_custom_call.1} parent=1 // pred_fallthru
      _
    // Predicated region
    $region18: #{tpu_custom_call.1} parent=1 // pred_check
      _
    $region19: #{tpu_custom_call.1} parent=1 // pred_check_branch
      %34 = sbr.rel (0) target = $region21
    $region20: #{tpu_custom_call.1} parent=1 // pred_region
      _
    $region21: #{tpu_custom_call.1} parent=1 // pred_fallthru
      _
    // Predicated region
    $region22: #{tpu_custom_call.1} parent=1 // pred_check
      _
    $region23: #{tpu_custom_call.1} parent=1 // pred_check_branch
      %36 = sbr.rel (0) target = $region25
    $region24: #{tpu_custom_call.1} parent=1 // pred_region
      _
    $region25: #{tpu_custom_call.1} parent=1 // pred_fallthru
      _
    // Predicated region
    $region26: #{tpu_custom_call.1} parent=1 // pred_check
      _
    $region27: #{tpu_custom_call.1} parent=1 // pred_check_branch
      %38 = sbr.rel (0) target = $region29
    $region28: #{tpu_custom_call.1} parent=1 // pred_region
      _
    $region29: #{tpu_custom_call.1} parent=1 // pred_fallthru
      _
    // Predicated region
    $region30: #{tpu_custom_call.1} parent=1 // pred_check
      _
    $region31: #{tpu_custom_call.1} parent=1 // pred_check_branch
      %40 = sbr.rel (0) target = $region33
    $region32: #{tpu_custom_call.1} parent=1 // pred_region
      _
    $region33: #{tpu_custom_call.1} parent=1 // pred_fallthru
      _
    // Predicated region
    $region34: #{tpu_custom_call.1} parent=1 // pred_check
      _
    $region35: #{tpu_custom_call.1} parent=1 // pred_check_branch
      %42 = sbr.rel (0) target = $region37
    $region36: #{tpu_custom_call.1} parent=1 // pred_region
      _
    $region37: #{tpu_custom_call.1} parent=1 // pred_fallthru
      _
    // Predicated region
    $region38: #{tpu_custom_call.1} parent=1 // pred_check
      _
    $region39: #{tpu_custom_call.1} parent=1 // pred_check_branch
      %44 = sbr.rel (0) target = $region41
    $region40: #{tpu_custom_call.1} parent=1 // pred_region
      _
    $region41: #{tpu_custom_call.1} parent=1 // pred_fallthru
      _
    // Predicated region
    $region42: #{tpu_custom_call.1} parent=1 // pred_check
      _
    $region43: #{tpu_custom_call.1} parent=1 // pred_check_branch
      %46 = sbr.rel (0) target = $region45
    $region44: #{tpu_custom_call.1} parent=1 // pred_region
      _
    $region45: #{tpu_custom_call.1} parent=1 // pred_fallthru
      _
    // Predicated region
    $region46: #{tpu_custom_call.1} parent=1 // pred_check
      _
    $region47: #{tpu_custom_call.1} parent=1 // pred_check_branch
      %48 = sbr.rel (0) target = $region49
    $region48: #{tpu_custom_call.1} parent=1 // pred_region
      _
    $region49: #{tpu_custom_call.1} parent=1 // pred_fallthru
      _
    // Predicated region
    $region50: #{tpu_custom_call.1} parent=1 // pred_check
      _
    $region51: #{tpu_custom_call.1} parent=1 // pred_check_branch
      %50 = sbr.rel (0) target = $region53
    $region52: #{tpu_custom_call.1} parent=1 // pred_region
      _
    $region53: #{tpu_custom_call.1} parent=1 // pred_fallthru
      _
    // Predicated region
    $region54: #{tpu_custom_call.1} parent=1 // pred_check
      _
    $region55: #{tpu_custom_call.1} parent=1 // pred_check_branch
      %52 = sbr.rel (0) target = $region57
    $region56: #{tpu_custom_call.1} parent=1 // pred_region
      _
    $region57: #{tpu_custom_call.1} parent=1 // pred_fallthru
      _
    // Predicated region
    $region58: #{tpu_custom_call.1} parent=1 // pred_check
      _
    $region59: #{tpu_custom_call.1} parent=1 // pred_check_branch
      %54 = sbr.rel (0) target = $region61
    $region60: #{tpu_custom_call.1} parent=1 // pred_region
      _
    $region61: #{tpu_custom_call.1} parent=1 // pred_fallthru
      _
    // Predicated region
    $region62: #{tpu_custom_call.1} parent=1 // pred_check
      _
    $region63: #{tpu_custom_call.1} parent=1 // pred_check_branch
      %56 = sbr.rel (0) target = $region65
    $region64: #{tpu_custom_call.1} parent=1 // pred_region
      _
    $region65: #{tpu_custom_call.1} parent=1 // pred_fallthru
      _
    // Predicated region
    $region66: #{tpu_custom_call.1} parent=1 // pred_check
      _
    $region67: #{tpu_custom_call.1} parent=1 // pred_check_branch
      %58 = sbr.rel (0) target = $region69
    $region68: #{tpu_custom_call.1} parent=1 // pred_region
      _
    $region69: #{tpu_custom_call.1} parent=1 // pred_fallthru
      _
    %v59 = vld [vmem:[%s0] sm:$0xff]
    %v60 = vld [vmem:[%s0 + $0x8] sm:$0xff]
    %v61 = vld [vmem:[%s0 + $0x10] sm:$0xff]
    %v62 = vld [vmem:[%s0 + $0x18] sm:$0xff]
    %v63 = vld [vmem:[%s0 + $0x20] sm:$0xff]
    %v64 = vld [vmem:[%s0 + $0x28] sm:$0xff]
    %v65 = vld [vmem:[%s0 + $0x30] sm:$0xff]
    %v66 = vld [vmem:[%s0 + $0x38] sm:$0xff]
    %v67 = vld [vmem:[%s1] sm:$0x1]
    %69 = vset.pattern.permute.xlu0 0
    %70 = vperm.xlu0 %69, %v59
    %v71 = vpop.permute.xlu0 %70
    %74 = vset.pattern.permute.xlu0 0
    %75 = vperm.xlu0 %74, %v60
    %v76 = vpop.permute.xlu0 %75
    %79 = vset.pattern.permute.xlu0 0
    %80 = vperm.xlu0 %79, %v61
    %v81 = vpop.permute.xlu0 %80
    %84 = vset.pattern.permute.xlu0 0
    %85 = vperm.xlu0 %84, %v62
    %v86 = vpop.permute.xlu0 %85
    %89 = vset.pattern.permute.xlu0 0
    %90 = vperm.xlu0 %89, %v63
    %v91 = vpop.permute.xlu0 %90
    %94 = vset.pattern.permute.xlu0 0
    %95 = vperm.xlu0 %94, %v64
    %v96 = vpop.permute.xlu0 %95
    %99 = vset.pattern.permute.xlu0 0
    %100 = vperm.xlu0 %99, %v65
    %v101 = vpop.permute.xlu0 %100
    %104 = vset.pattern.permute.xlu0 0
    %105 = vperm.xlu0 %104, %v66
    %v106 = vpop.permute.xlu0 %105
    %v108 = vlaneseq
    %v109 = vshrl.u32 %v108, 7
    %v110 = vsub.s32 0, %v109
    %v111 = vrot.slane %v67, %v110
    %v112 = vmul.f32 %v71, %v111
    %v113 = vmul.f32 %v76, %v111
    %v114 = vmul.f32 %v81, %v111
    %v115 = vmul.f32 %v86, %v111
    %v116 = vmul.f32 %v91, %v111
    %v117 = vmul.f32 %v96, %v111
    %v118 = vmul.f32 %v101, %v111
    %v119 = vmul.f32 %v106, %v111
    %v120 = vld [vmem:[%s1 + $0x1] sm:$0x1]
    %121 = vset.pattern.permute.xlu0 1
    %122 = vperm.xlu0 %121, %v59
    %v123 = vpop.permute.xlu0 %122
    %125 = vset.pattern.permute.xlu0 1
    %126 = vperm.xlu0 %125, %v60
    %v127 = vpop.permute.xlu0 %126
    %129 = vset.pattern.permute.xlu0 1
    %130 = vperm.xlu0 %129, %v61
    %v131 = vpop.permute.xlu0 %130
    %133 = vset.pattern.permute.xlu0 1
    %134 = vperm.xlu0 %133, %v62
    %v135 = vpop.permute.xlu0 %134
    %137 = vset.pattern.permute.xlu0 1
    %138 = vperm.xlu0 %137, %v63
    %v139 = vpop.permute.xlu0 %138
    %141 = vset.pattern.permute.xlu0 1
    %142 = vperm.xlu0 %141, %v64
    %v143 = vpop.permute.xlu0 %142
    %145 = vset.pattern.permute.xlu0 1
    %146 = vperm.xlu0 %145, %v65
    %v147 = vpop.permute.xlu0 %146
    %149 = vset.pattern.permute.xlu0 1
    %150 = vperm.xlu0 %149, %v66
    %v151 = vpop.permute.xlu0 %150
    %v153 = vlaneseq
    %v154 = vshrl.u32 %v153, 7
    %v155 = vsub.s32 0, %v154
    %v156 = vrot.slane %v120, %v155
    %v157 = vmul.f32 %v123, %v156
    %v158 = vmul.f32 %v127, %v156
    %v159 = vmul.f32 %v131, %v156
    %v160 = vmul.f32 %v135, %v156
    %v161 = vmul.f32 %v139, %v156
    %v162 = vmul.f32 %v143, %v156
    %v163 = vmul.f32 %v147, %v156
    %v164 = vmul.f32 %v151, %v156
    %v165 = vadd.f32 %v112, %v157
    %v166 = vadd.f32 %v113, %v158
    %v167 = vadd.f32 %v114, %v159
    %v168 = vadd.f32 %v115, %v160
    %v169 = vadd.f32 %v116, %v161
    %v170 = vadd.f32 %v117, %v162
    %v171 = vadd.f32 %v118, %v163
    %v172 = vadd.f32 %v119, %v164
    %v173 = vld [vmem:[%s1 + $0x2] sm:$0x1]
    %174 = vset.pattern.permute.xlu0 2
    %175 = vperm.xlu0 %174, %v59
    %v176 = vpop.permute.xlu0 %175
    %178 = vset.pattern.permute.xlu0 2
    %179 = vperm.xlu0 %178, %v60
    %v180 = vpop.permute.xlu0 %179
    %182 = vset.pattern.permute.xlu0 2
    %183 = vperm.xlu0 %182, %v61
    %v184 = vpop.permute.xlu0 %183
    %186 = vset.pattern.permute.xlu0 2
    %187 = vperm.xlu0 %186, %v62
    %v188 = vpop.permute.xlu0 %187
    %190 = vset.pattern.permute.xlu0 2
    %191 = vperm.xlu0 %190, %v63
    %v192 = vpop.permute.xlu0 %191
    %194 = vset.pattern.permute.xlu0 2
    %195 = vperm.xlu0 %194, %v64
    %v196 = vpop.permute.xlu0 %195
    %198 = vset.pattern.permute.xlu0 2
    %199 = vperm.xlu0 %198, %v65
    %v200 = vpop.permute.xlu0 %199
    %202 = vset.pattern.permute.xlu0 2
    %203 = vperm.xlu0 %202, %v66
    %v204 = vpop.permute.xlu0 %203
    %v206 = vlaneseq
    %v207 = vshrl.u32 %v206, 7
    %v208 = vsub.s32 0, %v207
    %v209 = vrot.slane %v173, %v208
    %v210 = vmul.f32 %v176, %v209
    %v211 = vmul.f32 %v180, %v209
    %v212 = vmul.f32 %v184, %v209
    %v213 = vmul.f32 %v188, %v209
    %v214 = vmul.f32 %v192, %v209
    %v215 = vmul.f32 %v196, %v209
    %v216 = vmul.f32 %v200, %v209
    %v217 = vmul.f32 %v204, %v209
    %v218 = vadd.f32 %v165, %v210
    %v219 = vadd.f32 %v166, %v211
    %v220 = vadd.f32 %v167, %v212
    %v221 = vadd.f32 %v168, %v213
    %v222 = vadd.f32 %v169, %v214
    %v223 = vadd.f32 %v170, %v215
    %v224 = vadd.f32 %v171, %v216
    %v225 = vadd.f32 %v172, %v217
    %v226 = vld [vmem:[%s2] sm:$0x1]
    %v228 = vlaneseq
    %v229 = vshrl.u32 %v228, 7
    %v230 = vsub.s32 0, %v229
    %v231 = vrot.slane %v226, %v230
    %v233 = vadd.f32 %v218, %v231
    %v234 = vadd.f32 %v219, %v231
    %v235 = vadd.f32 %v220, %v231
    %v236 = vadd.f32 %v221, %v231
    %v237 = vadd.f32 %v222, %v231
    %v238 = vadd.f32 %v223, %v231
    %v239 = vadd.f32 %v224, %v231
    %v240 = vadd.f32 %v225, %v231
    %v241 = vmax.f32 %v233, 0.0
    %v242 = vmax.f32 %v234, 0.0
    %v243 = vmax.f32 %v235, 0.0
    %v244 = vmax.f32 %v236, 0.0
    %v245 = vmax.f32 %v237, 0.0
    %v246 = vmax.f32 %v238, 0.0
    %v247 = vmax.f32 %v239, 0.0
    %v248 = vmax.f32 %v240, 0.0
    %v249 = vld [vmem:[%s3] sm:$0xff]
    %v250 = vld [vmem:[%s3 + $0x8] sm:$0xff]
    %v251 = vld [vmem:[%s3 + $0x10] sm:$0xff]
    %v252 = vld [vmem:[%s3 + $0x18] sm:$0xff]
    %v253 = vld [vmem:[%s3 + $0x20] sm:$0xff]
    %v254 = vld [vmem:[%s3 + $0x28] sm:$0xff]
    %v255 = vld [vmem:[%s3 + $0x30] sm:$0xff]
    %v256 = vld [vmem:[%s3 + $0x38] sm:$0xff]
    %v257 = vld [vmem:[%s3 + $0x40] sm:$0xff]
    %v258 = vld [vmem:[%s3 + $0x48] sm:$0xff]
    %v259 = vld [vmem:[%s3 + $0x50] sm:$0xff]
    %v260 = vld [vmem:[%s3 + $0x58] sm:$0xff]
    %v261 = vld [vmem:[%s3 + $0x60] sm:$0xff]
    %v262 = vld [vmem:[%s3 + $0x68] sm:$0xff]
    %v263 = vld [vmem:[%s3 + $0x70] sm:$0xff]
    %v264 = vld [vmem:[%s3 + $0x78] sm:$0xff]
    %v265 = vld [vmem:[%s4] sm:$0x1]
    %v267 = vlaneseq
    %v268 = vshrl.u32 %v267, 7
    %v269 = vsub.s32 0, %v268
    %v270 = vrot.slane %v265, %v269
    %272 = vmatprep.subr.mxu0 0.0
    %273 = vmatpush1.msra.mxu0 %v249
    %274 = vmatprep.subr.mxu0 0.0
    %275 = vmatpush1.msra.mxu0 %v250
    %276 = vmatprep.subr.mxu0 0.0
    %277 = vmatpush1.msra.mxu0 %v251
    %278 = vmatprep.subr.mxu0 0.0
    %279 = vmatpush1.msra.mxu0 %v252
    %280 = vmatprep.subr.mxu0 0.0
    %281 = vmatpush1.msra.mxu0 %v253
    %282 = vmatprep.subr.mxu0 0.0
    %283 = vmatpush1.msra.mxu0 %v254
    %284 = vmatprep.subr.mxu0 0.0
    %285 = vmatpush1.msra.mxu0 %v255
    %286 = vmatprep.subr.mxu0 0.0
    %287 = vmatpush1.msra.mxu0 %v256
    %288 = vmatprep.subr.mxu0 0.0
    %289 = vmatpush1.msra.mxu0 %v257
    %290 = vmatprep.subr.mxu0 0.0
    %291 = vmatpush1.msra.mxu0 %v258
    %292 = vmatprep.subr.mxu0 0.0
    %293 = vmatpush1.msra.mxu0 %v259
    %294 = vmatprep.subr.mxu0 0.0
    %295 = vmatpush1.msra.mxu0 %v260
    %296 = vmatprep.subr.mxu0 0.0
    %297 = vmatpush1.msra.mxu0 %v261
    %298 = vmatprep.subr.mxu0 0.0
    %299 = vmatpush1.msra.mxu0 %v262
    %300 = vmatprep.subr.mxu0 0.0
    %301 = vmatpush1.msra.mxu0 %v263
    %302 = vmatprep.subr.mxu0 0.0
    %303 = vmatpush1.msra.mxu0 %v264
    %304 = vmatprep.subr.mxu0 0.0
    %305 = vmatpush1.msra.mxu0 0.0
    %306 = vmatprep.subr.mxu0 0.0
    %307 = vmatpush1.msra.mxu0 0.0
    %308 = vmatprep.subr.mxu0 0.0
    %309 = vmatpush1.msra.mxu0 0.0
    %310 = vmatprep.subr.mxu0 0.0
    %311 = vmatpush1.msra.mxu0 0.0
    %312 = vmatprep.subr.mxu0 0.0
    %313 = vmatpush1.msra.mxu0 0.0
    %314 = vmatprep.subr.mxu0 0.0
    %315 = vmatpush1.msra.mxu0 0.0
    %316 = vmatprep.subr.mxu0 0.0
    %317 = vmatpush1.msra.mxu0 0.0
    %318 = vmatprep.subr.mxu0 0.0
    %319 = vmatpush1.msra.mxu0 0.0
    %320 = vmatprep.subr.mxu0 0.0
    %321 = vmatpush1.msra.mxu0 0.0
    %322 = vmatprep.subr.mxu0 0.0
    %323 = vmatpush1.msra.mxu0 0.0
    %324 = vmatprep.subr.mxu0 0.0
    %325 = vmatpush1.msra.mxu0 0.0
    %326 = vmatprep.subr.mxu0 0.0
    %327 = vmatpush1.msra.mxu0 0.0
    %328 = vmatprep.subr.mxu0 0.0
    %329 = vmatpush1.msra.mxu0 0.0
    %330 = vmatprep.subr.mxu0 0.0
    %331 = vmatpush1.msra.mxu0 0.0
    %332 = vmatprep.subr.mxu0 0.0
    %333 = vmatpush1.msra.mxu0 0.0
    %334 = vmatprep.subr.mxu0 0.0
    %335 = vmatpush1.msra.mxu0 0.0
    %336 = vmatprep.mubr.f32.mxu0 0.0
    %337 = vmatmul.mubr.f32.gmra.mrb[0].mxu0 %v241
    %v338 = vpop.f32.mrb[0].mxu0
    %v339 = vadd.f32 %v270, %v338
    %v340 = vpop.f32.mrb[0].mxu0
    %341 = vmatprep.mubr.f32.mxu0 0.0
    %342 = vmatmul.mubr.f32.gmra.mrb[0].mxu0 %v242
    %v343 = vpop.f32.mrb[0].mxu0
    %v344 = vadd.f32 %v270, %v343
    %v345 = vpop.f32.mrb[0].mxu0
    %346 = vmatprep.mubr.f32.mxu0 0.0
    %347 = vmatmul.mubr.f32.gmra.mrb[0].mxu0 %v243
    %v348 = vpop.f32.mrb[0].mxu0
    %v349 = vadd.f32 %v270, %v348
    %v350 = vpop.f32.mrb[0].mxu0
    %351 = vmatprep.mubr.f32.mxu0 0.0
    %352 = vmatmul.mubr.f32.gmra.mrb[0].mxu0 %v244
    %v353 = vpop.f32.mrb[0].mxu0
    %v354 = vadd.f32 %v270, %v353
    %v355 = vpop.f32.mrb[0].mxu0
    %356 = vmatprep.mubr.f32.mxu0 0.0
    %357 = vmatmul.mubr.f32.gmra.mrb[0].mxu0 %v245
    %v358 = vpop.f32.mrb[0].mxu0
    %v359 = vadd.f32 %v270, %v358
    %v360 = vpop.f32.mrb[0].mxu0
    %361 = vmatprep.mubr.f32.mxu0 0.0
    %362 = vmatmul.mubr.f32.gmra.mrb[0].mxu0 %v246
    %v363 = vpop.f32.mrb[0].mxu0
    %v364 = vadd.f32 %v270, %v363
    %v365 = vpop.f32.mrb[0].mxu0
    %366 = vmatprep.mubr.f32.mxu0 0.0
    %367 = vmatmul.mubr.f32.gmra.mrb[0].mxu0 %v247
    %v368 = vpop.f32.mrb[0].mxu0
    %v369 = vadd.f32 %v270, %v368
    %v370 = vpop.f32.mrb[0].mxu0
    %371 = vmatprep.mubr.f32.mxu0 0.0
    %372 = vmatmul.mubr.f32.gmra.mrb[0].mxu0 %v248
    %v373 = vpop.f32.mrb[0].mxu0
    %v374 = vadd.f32 %v270, %v373
    %v375 = vpop.f32.mrb[0].mxu0
    %376 = vdwg.mxu0
    %v377 = vmax.f32 %v339, 0.0
    %v378 = vmax.f32 %v344, 0.0
    %v379 = vmax.f32 %v349, 0.0
    %v380 = vmax.f32 %v354, 0.0
    %v381 = vmax.f32 %v359, 0.0
    %v382 = vmax.f32 %v364, 0.0
    %v383 = vmax.f32 %v369, 0.0
    %v384 = vmax.f32 %v374, 0.0
    %v385 = vld [vmem:[%s5] sm:$0xff]
    %v386 = vld [vmem:[%s5 + $0x8] sm:$0xff]
    %v387 = vld [vmem:[%s5 + $0x10] sm:$0xff]
    %v388 = vld [vmem:[%s5 + $0x18] sm:$0xff]
    %v389 = vld [vmem:[%s5 + $0x20] sm:$0xff]
    %v390 = vld [vmem:[%s5 + $0x28] sm:$0xff]
    %v391 = vld [vmem:[%s5 + $0x30] sm:$0xff]
    %v392 = vld [vmem:[%s5 + $0x38] sm:$0xff]
    %v393 = vld [vmem:[%s5 + $0x40] sm:$0xff]
    %v394 = vld [vmem:[%s5 + $0x48] sm:$0xff]
    %v395 = vld [vmem:[%s6] sm:$0x1]
    %v397 = vlaneseq
    %v398 = vshrl.u32 %v397, 7
    %v399 = vsub.s32 0, %v398
    %v400 = vrot.slane %v395, %v399
    %vm402 = vcmask 654336
    %v404 = vsel %vm402, %v377, 0
    %v407 = vsel %vm402, %v378, 0
    %v410 = vsel %vm402, %v379, 0
    %v413 = vsel %vm402, %v380, 0
    %v416 = vsel %vm402, %v381, 0
    %v419 = vsel %vm402, %v382, 0
    %v422 = vsel %vm402, %v383, 0
    %v425 = vsel %vm402, %v384, 0
    %427 = vmatprep.subr.mxu0 0.0
    %428 = vmatpush1.msra.mxu0 %v385
    %429 = vmatprep.subr.mxu0 0.0
    %430 = vmatpush1.msra.mxu0 %v386
    %431 = vmatprep.subr.mxu0 0.0
    %432 = vmatpush1.msra.mxu0 %v387
    %433 = vmatprep.subr.mxu0 0.0
    %434 = vmatpush1.msra.mxu0 %v388
    %435 = vmatprep.subr.mxu0 0.0
    %436 = vmatpush1.msra.mxu0 %v389
    %437 = vmatprep.subr.mxu0 0.0
    %438 = vmatpush1.msra.mxu0 %v390
    %439 = vmatprep.subr.mxu0 0.0
    %440 = vmatpush1.msra.mxu0 %v391
    %441 = vmatprep.subr.mxu0 0.0
    %442 = vmatpush1.msra.mxu0 %v392
    %443 = vmatprep.subr.mxu0 0.0
    %444 = vmatpush1.msra.mxu0 %v393
    %445 = vmatprep.subr.mxu0 0.0
    %446 = vmatpush1.msra.mxu0 %v394
    %447 = vmatprep.subr.mxu0 0.0
    %448 = vmatpush1.msra.mxu0 0.0
    %449 = vmatprep.subr.mxu0 0.0
    %450 = vmatpush1.msra.mxu0 0.0
    %451 = vmatprep.subr.mxu0 0.0
    %452 = vmatpush1.msra.mxu0 0.0
    %453 = vmatprep.subr.mxu0 0.0
    %454 = vmatpush1.msra.mxu0 0.0
    %455 = vmatprep.subr.mxu0 0.0
    %456 = vmatpush1.msra.mxu0 0.0
    %457 = vmatprep.subr.mxu0 0.0
    %458 = vmatpush1.msra.mxu0 0.0
    %459 = vmatprep.subr.mxu0 0.0
    %460 = vmatpush1.msra.mxu0 0.0
    %461 = vmatprep.subr.mxu0 0.0
    %462 = vmatpush1.msra.mxu0 0.0
    %463 = vmatprep.subr.mxu0 0.0
    %464 = vmatpush1.msra.mxu0 0.0
    %465 = vmatprep.subr.mxu0 0.0
    %466 = vmatpush1.msra.mxu0 0.0
    %467 = vmatprep.subr.mxu0 0.0
    %468 = vmatpush1.msra.mxu0 0.0
    %469 = vmatprep.subr.mxu0 0.0
    %470 = vmatpush1.msra.mxu0 0.0
    %471 = vmatprep.subr.mxu0 0.0
    %472 = vmatpush1.msra.mxu0 0.0
    %473 = vmatprep.subr.mxu0 0.0
    %474 = vmatpush1.msra.mxu0 0.0
    %475 = vmatprep.subr.mxu0 0.0
    %476 = vmatpush1.msra.mxu0 0.0
    %477 = vmatprep.subr.mxu0 0.0
    %478 = vmatpush1.msra.mxu0 0.0
    %479 = vmatprep.subr.mxu0 0.0
    %480 = vmatpush1.msra.mxu0 0.0
    %481 = vmatprep.subr.mxu0 0.0
    %482 = vmatpush1.msra.mxu0 0.0
    %483 = vmatprep.subr.mxu0 0.0
    %484 = vmatpush1.msra.mxu0 0.0
    %485 = vmatprep.subr.mxu0 0.0
    %486 = vmatpush1.msra.mxu0 0.0
    %487 = vmatprep.subr.mxu0 0.0
    %488 = vmatpush1.msra.mxu0 0.0
    %489 = vmatprep.subr.mxu0 0.0
    %490 = vmatpush1.msra.mxu0 0.0
    %491 = vmatprep.mubr.f32.mxu0 0.0
    %492 = vmatmul.mubr.f32.gmra.mrb[0].mxu0 %v404
    %v493 = vpop.f32.mrb[0].mxu0
    %v494 = vadd.f32 %v400, %v493
    %v495 = vpop.f32.mrb[0].mxu0
    %496 = vmatprep.mubr.f32.mxu0 0.0
    %497 = vmatmul.mubr.f32.gmra.mrb[0].mxu0 %v407
    %v498 = vpop.f32.mrb[0].mxu0
    %v499 = vadd.f32 %v400, %v498
    %v500 = vpop.f32.mrb[0].mxu0
    %501 = vmatprep.mubr.f32.mxu0 0.0
    %502 = vmatmul.mubr.f32.gmra.mrb[0].mxu0 %v410
    %v503 = vpop.f32.mrb[0].mxu0
    %v504 = vadd.f32 %v400, %v503
    %v505 = vpop.f32.mrb[0].mxu0
    %506 = vmatprep.mubr.f32.mxu0 0.0
    %507 = vmatmul.mubr.f32.gmra.mrb[0].mxu0 %v413
    %v508 = vpop.f32.mrb[0].mxu0
    %v509 = vadd.f32 %v400, %v508
    %v510 = vpop.f32.mrb[0].mxu0
    %511 = vmatprep.mubr.f32.mxu0 0.0
    %512 = vmatmul.mubr.f32.gmra.mrb[0].mxu0 %v416
    %v513 = vpop.f32.mrb[0].mxu0
    %v514 = vadd.f32 %v400, %v513
    %v515 = vpop.f32.mrb[0].mxu0
    %516 = vmatprep.mubr.f32.mxu0 0.0
    %517 = vmatmul.mubr.f32.gmra.mrb[0].mxu0 %v419
    %v518 = vpop.f32.mrb[0].mxu0
    %v519 = vadd.f32 %v400, %v518
    %v520 = vpop.f32.mrb[0].mxu0
    %521 = vmatprep.mubr.f32.mxu0 0.0
    %522 = vmatmul.mubr.f32.gmra.mrb[0].mxu0 %v422
    %v523 = vpop.f32.mrb[0].mxu0
    %v524 = vadd.f32 %v400, %v523
    %v525 = vpop.f32.mrb[0].mxu0
    %526 = vmatprep.mubr.f32.mxu0 0.0
    %527 = vmatmul.mubr.f32.gmra.mrb[0].mxu0 %v425
    %v528 = vpop.f32.mrb[0].mxu0
    %v529 = vadd.f32 %v400, %v528
    %v530 = vpop.f32.mrb[0].mxu0
    %531 = vdwg.mxu0
    %v532 = vmax.f32 %v494, 0.0
    %v533 = vmax.f32 %v499, 0.0
    %v534 = vmax.f32 %v504, 0.0
    %v535 = vmax.f32 %v509, 0.0
    %v536 = vmax.f32 %v514, 0.0
    %v537 = vmax.f32 %v519, 0.0
    %v538 = vmax.f32 %v524, 0.0
    %v539 = vmax.f32 %v529, 0.0
    %v540 = vld [vmem:[%s7] sm:$0xff]
    %v541 = vld [vmem:[%s7 + $0x8] sm:$0xff]
    %v542 = vld [vmem:[%s7 + $0x10] sm:$0xff]
    %v543 = vld [vmem:[%s7 + $0x18] sm:$0xff]
    %v544 = vld [vmem:[%s7 + $0x20] sm:$0xff]
    %v545 = vld [vmem:[%s7 + $0x28] sm:$0xff]
    %v546 = vld [vmem:[%s8] sm:$0x1]
    %v548 = vlaneseq
    %v549 = vshrl.u32 %v548, 7
    %v550 = vsub.s32 0, %v549
    %v551 = vrot.slane %v546, %v550
    %vm553 = vcmask 392192
    %v555 = vsel %vm553, %v532, 0
    %v558 = vsel %vm553, %v533, 0
    %v561 = vsel %vm553, %v534, 0
    %v564 = vsel %vm553, %v535, 0
    %v567 = vsel %vm553, %v536, 0
    %v570 = vsel %vm553, %v537, 0
    %v573 = vsel %vm553, %v538, 0
    %v576 = vsel %vm553, %v539, 0
    %578 = vmatprep.subr.mxu0 0.0
    %579 = vmatpush1.msra.mxu0 %v540
    %580 = vmatprep.subr.mxu0 0.0
    %581 = vmatpush1.msra.mxu0 %v541
    %582 = vmatprep.subr.mxu0 0.0
    %583 = vmatpush1.msra.mxu0 %v542
    %584 = vmatprep.subr.mxu0 0.0
    %585 = vmatpush1.msra.mxu0 %v543
    %586 = vmatprep.subr.mxu0 0.0
    %587 = vmatpush1.msra.mxu0 %v544
    %588 = vmatprep.subr.mxu0 0.0
    %589 = vmatpush1.msra.mxu0 %v545
    %590 = vmatprep.subr.mxu0 0.0
    %591 = vmatpush1.msra.mxu0 0.0
    %592 = vmatprep.subr.mxu0 0.0
    %593 = vmatpush1.msra.mxu0 0.0
    %594 = vmatprep.subr.mxu0 0.0
    %595 = vmatpush1.msra.mxu0 0.0
    %596 = vmatprep.subr.mxu0 0.0
    %597 = vmatpush1.msra.mxu0 0.0
    %598 = vmatprep.subr.mxu0 0.0
    %599 = vmatpush1.msra.mxu0 0.0
    %600 = vmatprep.subr.mxu0 0.0
    %601 = vmatpush1.msra.mxu0 0.0
    %602 = vmatprep.subr.mxu0 0.0
    %603 = vmatpush1.msra.mxu0 0.0
    %604 = vmatprep.subr.mxu0 0.0
    %605 = vmatpush1.msra.mxu0 0.0
    %606 = vmatprep.subr.mxu0 0.0
    %607 = vmatpush1.msra.mxu0 0.0
    %608 = vmatprep.subr.mxu0 0.0
    %609 = vmatpush1.msra.mxu0 0.0
    %610 = vmatprep.subr.mxu0 0.0
    %611 = vmatpush1.msra.mxu0 0.0
    %612 = vmatprep.subr.mxu0 0.0
    %613 = vmatpush1.msra.mxu0 0.0
    %614 = vmatprep.subr.mxu0 0.0
    %615 = vmatpush1.msra.mxu0 0.0
    %616 = vmatprep.subr.mxu0 0.0
    %617 = vmatpush1.msra.mxu0 0.0
    %618 = vmatprep.subr.mxu0 0.0
    %619 = vmatpush1.msra.mxu0 0.0
    %620 = vmatprep.subr.mxu0 0.0
    %621 = vmatpush1.msra.mxu0 0.0
    %622 = vmatprep.subr.mxu0 0.0
    %623 = vmatpush1.msra.mxu0 0.0
    %624 = vmatprep.subr.mxu0 0.0
    %625 = vmatpush1.msra.mxu0 0.0
    %626 = vmatprep.subr.mxu0 0.0
    %627 = vmatpush1.msra.mxu0 0.0
    %628 = vmatprep.subr.mxu0 0.0
    %629 = vmatpush1.msra.mxu0 0.0
    %630 = vmatprep.subr.mxu0 0.0
    %631 = vmatpush1.msra.mxu0 0.0
    %632 = vmatprep.subr.mxu0 0.0
    %633 = vmatpush1.msra.mxu0 0.0
    %634 = vmatprep.subr.mxu0 0.0
    %635 = vmatpush1.msra.mxu0 0.0
    %636 = vmatprep.subr.mxu0 0.0
    %637 = vmatpush1.msra.mxu0 0.0
    %638 = vmatprep.subr.mxu0 0.0
    %639 = vmatpush1.msra.mxu0 0.0
    %640 = vmatprep.subr.mxu0 0.0
    %641 = vmatpush1.msra.mxu0 0.0
    %642 = vmatprep.mubr.f32.mxu0 0.0
    %643 = vmatmul.mubr.f32.gmra.mrb[0].mxu0 %v555
    %v644 = vpop.f32.mrb[0].mxu0
    %v645 = vadd.f32 %v551, %v644
    %v646 = vpop.f32.mrb[0].mxu0
    %647 = vmatprep.mubr.f32.mxu0 0.0
    %648 = vmatmul.mubr.f32.gmra.mrb[0].mxu0 %v558
    %v649 = vpop.f32.mrb[0].mxu0
    %v650 = vadd.f32 %v551, %v649
    %v651 = vpop.f32.mrb[0].mxu0
    %652 = vmatprep.mubr.f32.mxu0 0.0
    %653 = vmatmul.mubr.f32.gmra.mrb[0].mxu0 %v561
    %v654 = vpop.f32.mrb[0].mxu0
    %v655 = vadd.f32 %v551, %v654
    %v656 = vpop.f32.mrb[0].mxu0
    %657 = vmatprep.mubr.f32.mxu0 0.0
    %658 = vmatmul.mubr.f32.gmra.mrb[0].mxu0 %v564
    %v659 = vpop.f32.mrb[0].mxu0
    %v660 = vadd.f32 %v551, %v659
    %v661 = vpop.f32.mrb[0].mxu0
    %662 = vmatprep.mubr.f32.mxu0 0.0
    %663 = vmatmul.mubr.f32.gmra.mrb[0].mxu0 %v567
    %v664 = vpop.f32.mrb[0].mxu0
    %v665 = vadd.f32 %v551, %v664
    %v666 = vpop.f32.mrb[0].mxu0
    %667 = vmatprep.mubr.f32.mxu0 0.0
    %668 = vmatmul.mubr.f32.gmra.mrb[0].mxu0 %v570
    %v669 = vpop.f32.mrb[0].mxu0
    %v670 = vadd.f32 %v551, %v669
    %v671 = vpop.f32.mrb[0].mxu0
    %672 = vmatprep.mubr.f32.mxu0 0.0
    %673 = vmatmul.mubr.f32.gmra.mrb[0].mxu0 %v573
    %v674 = vpop.f32.mrb[0].mxu0
    %v675 = vadd.f32 %v551, %v674
    %v676 = vpop.f32.mrb[0].mxu0
    %677 = vmatprep.mubr.f32.mxu0 0.0
    %678 = vmatmul.mubr.f32.gmra.mrb[0].mxu0 %v576
    %v679 = vpop.f32.mrb[0].mxu0
    %v680 = vadd.f32 %v551, %v679
    %v681 = vpop.f32.mrb[0].mxu0
    %682 = vdwg.mxu0
    %v683 = vmax.f32 %v645, 0.0
    %v684 = vmax.f32 %v650, 0.0
    %v685 = vmax.f32 %v655, 0.0
    %v686 = vmax.f32 %v660, 0.0
    %v687 = vmax.f32 %v665, 0.0
    %v688 = vmax.f32 %v670, 0.0
    %v689 = vmax.f32 %v675, 0.0
    %v690 = vmax.f32 %v680, 0.0
    %v691 = vld [vmem:[%s9] sm:$0xff]
    %v692 = vld [vmem:[%s9 + $0x8] sm:$0xff]
    %v693 = vld [vmem:[%s9 + $0x10] sm:$0xff]
    %v694 = vld [vmem:[%s9 + $0x18] sm:$0xff]
    %v695 = vld [vmem:[%s10] sm:$0x1]
    %v697 = vlaneseq
    %v698 = vshrl.u32 %v697, 7
    %v699 = vsub.s32 0, %v698
    %v700 = vrot.slane %v695, %v699
    %vm702 = vcmask 261120
    %v704 = vsel %vm702, %v683, 0
    %v707 = vsel %vm702, %v684, 0
    %v710 = vsel %vm702, %v685, 0
    %v713 = vsel %vm702, %v686, 0
    %v716 = vsel %vm702, %v687, 0
    %v719 = vsel %vm702, %v688, 0
    %v722 = vsel %vm702, %v689, 0
    %v725 = vsel %vm702, %v690, 0
    %727 = vmatprep.subr.mxu0 0.0
    %728 = vmatpush1.msra.mxu0 %v691
    %729 = vmatprep.subr.mxu0 0.0
    %730 = vmatpush1.msra.mxu0 %v692
    %731 = vmatprep.subr.mxu0 0.0
    %732 = vmatpush1.msra.mxu0 %v693
    %733 = vmatprep.subr.mxu0 0.0
    %734 = vmatpush1.msra.mxu0 %v694
    %735 = vmatprep.subr.mxu0 0.0
    %736 = vmatpush1.msra.mxu0 0.0
    %737 = vmatprep.subr.mxu0 0.0
    %738 = vmatpush1.msra.mxu0 0.0
    %739 = vmatprep.subr.mxu0 0.0
    %740 = vmatpush1.msra.mxu0 0.0
    %741 = vmatprep.subr.mxu0 0.0
    %742 = vmatpush1.msra.mxu0 0.0
    %743 = vmatprep.subr.mxu0 0.0
    %744 = vmatpush1.msra.mxu0 0.0
    %745 = vmatprep.subr.mxu0 0.0
    %746 = vmatpush1.msra.mxu0 0.0
    %747 = vmatprep.subr.mxu0 0.0
    %748 = vmatpush1.msra.mxu0 0.0
    %749 = vmatprep.subr.mxu0 0.0
    %750 = vmatpush1.msra.mxu0 0.0
    %751 = vmatprep.subr.mxu0 0.0
    %752 = vmatpush1.msra.mxu0 0.0
    %753 = vmatprep.subr.mxu0 0.0
    %754 = vmatpush1.msra.mxu0 0.0
    %755 = vmatprep.subr.mxu0 0.0
    %756 = vmatpush1.msra.mxu0 0.0
    %757 = vmatprep.subr.mxu0 0.0
    %758 = vmatpush1.msra.mxu0 0.0
    %759 = vmatprep.subr.mxu0 0.0
    %760 = vmatpush1.msra.mxu0 0.0
    %761 = vmatprep.subr.mxu0 0.0
    %762 = vmatpush1.msra.mxu0 0.0
    %763 = vmatprep.subr.mxu0 0.0
    %764 = vmatpush1.msra.mxu0 0.0
    %765 = vmatprep.subr.mxu0 0.0
    %766 = vmatpush1.msra.mxu0 0.0
    %767 = vmatprep.subr.mxu0 0.0
    %768 = vmatpush1.msra.mxu0 0.0
    %769 = vmatprep.subr.mxu0 0.0
    %770 = vmatpush1.msra.mxu0 0.0
    %771 = vmatprep.subr.mxu0 0.0
    %772 = vmatpush1.msra.mxu0 0.0
    %773 = vmatprep.subr.mxu0 0.0
    %774 = vmatpush1.msra.mxu0 0.0
    %775 = vmatprep.subr.mxu0 0.0
    %776 = vmatpush1.msra.mxu0 0.0
    %777 = vmatprep.subr.mxu0 0.0
    %778 = vmatpush1.msra.mxu0 0.0
    %779 = vmatprep.subr.mxu0 0.0
    %780 = vmatpush1.msra.mxu0 0.0
    %781 = vmatprep.subr.mxu0 0.0
    %782 = vmatpush1.msra.mxu0 0.0
    %783 = vmatprep.subr.mxu0 0.0
    %784 = vmatpush1.msra.mxu0 0.0
    %785 = vmatprep.subr.mxu0 0.0
    %786 = vmatpush1.msra.mxu0 0.0
    %787 = vmatprep.subr.mxu0 0.0
    %788 = vmatpush1.msra.mxu0 0.0
    %789 = vmatprep.subr.mxu0 0.0
    %790 = vmatpush1.msra.mxu0 0.0
    %791 = vmatprep.mubr.f32.mxu0 0.0
    %792 = vmatmul.mubr.f32.gmra.mrb[0].mxu0 %v704
    %v793 = vpop.f32.mrb[0].mxu0
    %v794 = vadd.f32 %v700, %v793
    %v795 = vpop.f32.mrb[0].mxu0
    %796 = vmatprep.mubr.f32.mxu0 0.0
    %797 = vmatmul.mubr.f32.gmra.mrb[0].mxu0 %v707
    %v798 = vpop.f32.mrb[0].mxu0
    %v799 = vadd.f32 %v700, %v798
    %v800 = vpop.f32.mrb[0].mxu0
    %801 = vmatprep.mubr.f32.mxu0 0.0
    %802 = vmatmul.mubr.f32.gmra.mrb[0].mxu0 %v710
    %v803 = vpop.f32.mrb[0].mxu0
    %v804 = vadd.f32 %v700, %v803
    %v805 = vpop.f32.mrb[0].mxu0
    %806 = vmatprep.mubr.f32.mxu0 0.0
    %807 = vmatmul.mubr.f32.gmra.mrb[0].mxu0 %v713
    %v808 = vpop.f32.mrb[0].mxu0
    %v809 = vadd.f32 %v700, %v808
    %v810 = vpop.f32.mrb[0].mxu0
    %811 = vmatprep.mubr.f32.mxu0 0.0
    %812 = vmatmul.mubr.f32.gmra.mrb[0].mxu0 %v716
    %v813 = vpop.f32.mrb[0].mxu0
    %v814 = vadd.f32 %v700, %v813
    %v815 = vpop.f32.mrb[0].mxu0
    %816 = vmatprep.mubr.f32.mxu0 0.0
    %817 = vmatmul.mubr.f32.gmra.mrb[0].mxu0 %v719
    %v818 = vpop.f32.mrb[0].mxu0
    %v819 = vadd.f32 %v700, %v818
    %v820 = vpop.f32.mrb[0].mxu0
    %821 = vmatprep.mubr.f32.mxu0 0.0
    %822 = vmatmul.mubr.f32.gmra.mrb[0].mxu0 %v722
    %v823 = vpop.f32.mrb[0].mxu0
    %v824 = vadd.f32 %v700, %v823
    %v825 = vpop.f32.mrb[0].mxu0
    %826 = vmatprep.mubr.f32.mxu0 0.0
    %827 = vmatmul.mubr.f32.gmra.mrb[0].mxu0 %v725
    %v828 = vpop.f32.mrb[0].mxu0
    %v829 = vadd.f32 %v700, %v828
    %v830 = vpop.f32.mrb[0].mxu0
    %831 = vdwg.mxu0
    %v832 = vld [vmem:[%s11] sm:$0xff]
    %v833 = vld [vmem:[%s11 + $0x8] sm:$0xff]
    %v834 = vld [vmem:[%s11 + $0x10] sm:$0xff]
    %v835 = vld [vmem:[%s11 + $0x18] sm:$0xff]
    %v836 = vld [vmem:[%s12] sm:$0x1]
    %v838 = vlaneseq
    %v839 = vshrl.u32 %v838, 7
    %v840 = vsub.s32 0, %v839
    %v841 = vrot.slane %v836, %v840
    %843 = vrot.lane.b32.xlu0 %v683, 96
    %v844 = vpop.permute.xlu0 %843
    %845 = vrot.lane.b32.xlu0 %v684, 96
    %v846 = vpop.permute.xlu0 %845
    %847 = vrot.lane.b32.xlu0 %v685, 96
    %v848 = vpop.permute.xlu0 %847
    %849 = vrot.lane.b32.xlu0 %v686, 96
    %v850 = vpop.permute.xlu0 %849
    %851 = vrot.lane.b32.xlu0 %v687, 96
    %v852 = vpop.permute.xlu0 %851
    %853 = vrot.lane.b32.xlu0 %v688, 96
    %v854 = vpop.permute.xlu0 %853
    %855 = vrot.lane.b32.xlu0 %v689, 96
    %v856 = vpop.permute.xlu0 %855
    %857 = vrot.lane.b32.xlu0 %v690, 96
    %v858 = vpop.permute.xlu0 %857
    %v859 = vsel %vm702, %v844, 0
    %v861 = vsel %vm702, %v846, 0
    %v863 = vsel %vm702, %v848, 0
    %v865 = vsel %vm702, %v850, 0
    %v867 = vsel %vm702, %v852, 0
    %v869 = vsel %vm702, %v854, 0
    %v871 = vsel %vm702, %v856, 0
    %v873 = vsel %vm702, %v858, 0
    %875 = vmatprep.subr.mxu0 0.0
    %876 = vmatpush1.msra.mxu0 %v832
    %877 = vmatprep.subr.mxu0 0.0
    %878 = vmatpush1.msra.mxu0 %v833
    %879 = vmatprep.subr.mxu0 0.0
    %880 = vmatpush1.msra.mxu0 %v834
    %881 = vmatprep.subr.mxu0 0.0
    %882 = vmatpush1.msra.mxu0 %v835
    %883 = vmatprep.subr.mxu0 0.0
    %884 = vmatpush1.msra.mxu0 0.0
    %885 = vmatprep.subr.mxu0 0.0
    %886 = vmatpush1.msra.mxu0 0.0
    %887 = vmatprep.subr.mxu0 0.0
    %888 = vmatpush1.msra.mxu0 0.0
    %889 = vmatprep.subr.mxu0 0.0
    %890 = vmatpush1.msra.mxu0 0.0
    %891 = vmatprep.subr.mxu0 0.0
    %892 = vmatpush1.msra.mxu0 0.0
    %893 = vmatprep.subr.mxu0 0.0
    %894 = vmatpush1.msra.mxu0 0.0
    %895 = vmatprep.subr.mxu0 0.0
    %896 = vmatpush1.msra.mxu0 0.0
    %897 = vmatprep.subr.mxu0 0.0
    %898 = vmatpush1.msra.mxu0 0.0
    %899 = vmatprep.subr.mxu0 0.0
    %900 = vmatpush1.msra.mxu0 0.0
    %901 = vmatprep.subr.mxu0 0.0
    %902 = vmatpush1.msra.mxu0 0.0
    %903 = vmatprep.subr.mxu0 0.0
    %904 = vmatpush1.msra.mxu0 0.0
    %905 = vmatprep.subr.mxu0 0.0
    %906 = vmatpush1.msra.mxu0 0.0
    %907 = vmatprep.subr.mxu0 0.0
    %908 = vmatpush1.msra.mxu0 0.0
    %909 = vmatprep.subr.mxu0 0.0
    %910 = vmatpush1.msra.mxu0 0.0
    %911 = vmatprep.subr.mxu0 0.0
    %912 = vmatpush1.msra.mxu0 0.0
    %913 = vmatprep.subr.mxu0 0.0
    %914 = vmatpush1.msra.mxu0 0.0
    %915 = vmatprep.subr.mxu0 0.0
    %916 = vmatpush1.msra.mxu0 0.0
    %917 = vmatprep.subr.mxu0 0.0
    %918 = vmatpush1.msra.mxu0 0.0
    %919 = vmatprep.subr.mxu0 0.0
    %920 = vmatpush1.msra.mxu0 0.0
    %921 = vmatprep.subr.mxu0 0.0
    %922 = vmatpush1.msra.mxu0 0.0
    %923 = vmatprep.subr.mxu0 0.0
    %924 = vmatpush1.msra.mxu0 0.0
    %925 = vmatprep.subr.mxu0 0.0
    %926 = vmatpush1.msra.mxu0 0.0
    %927 = vmatprep.subr.mxu0 0.0
    %928 = vmatpush1.msra.mxu0 0.0
    %929 = vmatprep.subr.mxu0 0.0
    %930 = vmatpush1.msra.mxu0 0.0
    %931 = vmatprep.subr.mxu0 0.0
    %932 = vmatpush1.msra.mxu0 0.0
    %933 = vmatprep.subr.mxu0 0.0
    %934 = vmatpush1.msra.mxu0 0.0
    %935 = vmatprep.subr.mxu0 0.0
    %936 = vmatpush1.msra.mxu0 0.0
    %937 = vmatprep.subr.mxu0 0.0
    %938 = vmatpush1.msra.mxu0 0.0
    %939 = vmatprep.mubr.f32.mxu0 0.0
    %940 = vmatmul.mubr.f32.gmra.mrb[0].mxu0 %v859
    %v941 = vpop.f32.mrb[0].mxu0
    %v942 = vadd.f32 %v841, %v941
    %v943 = vpop.f32.mrb[0].mxu0
    %944 = vmatprep.mubr.f32.mxu0 0.0
    %945 = vmatmul.mubr.f32.gmra.mrb[0].mxu0 %v861
    %v946 = vpop.f32.mrb[0].mxu0
    %v947 = vadd.f32 %v841, %v946
    %v948 = vpop.f32.mrb[0].mxu0
    %949 = vmatprep.mubr.f32.mxu0 0.0
    %950 = vmatmul.mubr.f32.gmra.mrb[0].mxu0 %v863
    %v951 = vpop.f32.mrb[0].mxu0
    %v952 = vadd.f32 %v841, %v951
    %v953 = vpop.f32.mrb[0].mxu0
    %954 = vmatprep.mubr.f32.mxu0 0.0
    %955 = vmatmul.mubr.f32.gmra.mrb[0].mxu0 %v865
    %v956 = vpop.f32.mrb[0].mxu0
    %v957 = vadd.f32 %v841, %v956
    %v958 = vpop.f32.mrb[0].mxu0
    %959 = vmatprep.mubr.f32.mxu0 0.0
    %960 = vmatmul.mubr.f32.gmra.mrb[0].mxu0 %v867
    %v961 = vpop.f32.mrb[0].mxu0
    %v962 = vadd.f32 %v841, %v961
    %v963 = vpop.f32.mrb[0].mxu0
    %964 = vmatprep.mubr.f32.mxu0 0.0
    %965 = vmatmul.mubr.f32.gmra.mrb[0].mxu0 %v869
    %v966 = vpop.f32.mrb[0].mxu0
    %v967 = vadd.f32 %v841, %v966
    %v968 = vpop.f32.mrb[0].mxu0
    %969 = vmatprep.mubr.f32.mxu0 0.0
    %970 = vmatmul.mubr.f32.gmra.mrb[0].mxu0 %v871
    %v971 = vpop.f32.mrb[0].mxu0
    %v972 = vadd.f32 %v841, %v971
    %v973 = vpop.f32.mrb[0].mxu0
    %974 = vmatprep.mubr.f32.mxu0 0.0
    %975 = vmatmul.mubr.f32.gmra.mrb[0].mxu0 %v873
    %v976 = vpop.f32.mrb[0].mxu0
    %v977 = vadd.f32 %v841, %v976
    %v978 = vpop.f32.mrb[0].mxu0
    %979 = vdwg.mxu0
    %v980 = vmax.f32 %v942, 0.0
    %v981 = vmax.f32 %v947, 0.0
    %v982 = vmax.f32 %v952, 0.0
    %v983 = vmax.f32 %v957, 0.0
    %v984 = vmax.f32 %v962, 0.0
    %v985 = vmax.f32 %v967, 0.0
    %v986 = vmax.f32 %v972, 0.0
    %v987 = vmax.f32 %v977, 0.0
    %v988 = vld [vmem:[%s13] sm:$0x1]
    %v990 = vlaneseq
    %v991 = vshrl.u32 %v990, 7
    %v992 = vsub.s32 0, %v991
    %v993 = vrot.slane %v988, %v992
    %v995 = vmul.f32 %v980, %v993
    %v996 = vmul.f32 %v981, %v993
    %v997 = vmul.f32 %v982, %v993
    %v998 = vmul.f32 %v983, %v993
    %v999 = vmul.f32 %v984, %v993
    %v1000 = vmul.f32 %v985, %v993
    %v1001 = vmul.f32 %v986, %v993
    %v1002 = vmul.f32 %v987, %v993
    %vm1003 = vcmask 97280
    %v1004 = vsel %vm1003, %v995, 0.0
    %1005 = vadd.xlane.f32.xlu0 %v1004
    %v1006 = vpop.xlane.xlu0 %1005
    %v1007 = vsel %vm1003, %v996, 0.0
    %1008 = vadd.xlane.f32.xlu0 %v1007
    %v1009 = vpop.xlane.xlu0 %1008
    %v1010 = vsel %vm1003, %v997, 0.0
    %1011 = vadd.xlane.f32.xlu0 %v1010
    %v1012 = vpop.xlane.xlu0 %1011
    %v1013 = vsel %vm1003, %v998, 0.0
    %1014 = vadd.xlane.f32.xlu0 %v1013
    %v1015 = vpop.xlane.xlu0 %1014
    %v1016 = vsel %vm1003, %v999, 0.0
    %1017 = vadd.xlane.f32.xlu0 %v1016
    %v1018 = vpop.xlane.xlu0 %1017
    %v1019 = vsel %vm1003, %v1000, 0.0
    %1020 = vadd.xlane.f32.xlu0 %v1019
    %v1021 = vpop.xlane.xlu0 %1020
    %v1022 = vsel %vm1003, %v1001, 0.0
    %1023 = vadd.xlane.f32.xlu0 %v1022
    %v1024 = vpop.xlane.xlu0 %1023
    %v1025 = vsel %vm1003, %v1002, 0.0
    %1026 = vadd.xlane.f32.xlu0 %v1025
    %v1027 = vpop.xlane.xlu0 %1026
    %v1028 = vld [vmem:[#allocation2] sm:$0x1]
    %v1030 = vlaneseq
    %v1031 = vshrl.u32 %v1030, 7
    %v1032 = vsub.s32 0, %v1031
    %v1033 = vrot.slane %v1028, %v1032
    %v1035 = vadd.f32 %v1006, %v1033
    %v1036 = vadd.f32 %v1009, %v1033
    %v1037 = vadd.f32 %v1012, %v1033
    %v1038 = vadd.f32 %v1015, %v1033
    %v1039 = vadd.f32 %v1018, %v1033
    %v1040 = vadd.f32 %v1021, %v1033
    %v1041 = vadd.f32 %v1024, %v1033
    %v1042 = vadd.f32 %v1027, %v1033
    %vm1043 = vcmask 7168
    %v1044 = vsel %vm1043, %v1035, -inf
    %v1045 = vrot.slane %v1044, 4
    %v1046 = vmax.f32 %v1044, %v1045
    %v1047 = vrot.slane %v1046, 2
    %v1048 = vmax.f32 %v1046, %v1047
    %v1049 = vrot.slane %v1048, 1
    %v1050 = vmax.f32 %v1048, %v1049
    %v1051 = vsel %vm1043, %v1036, -inf
    %v1052 = vrot.slane %v1051, 4
    %v1053 = vmax.f32 %v1051, %v1052
    %v1054 = vrot.slane %v1053, 2
    %v1055 = vmax.f32 %v1053, %v1054
    %v1056 = vrot.slane %v1055, 1
    %v1057 = vmax.f32 %v1055, %v1056
    %v1058 = vsel %vm1043, %v1037, -inf
    %v1059 = vrot.slane %v1058, 4
    %v1060 = vmax.f32 %v1058, %v1059
    %v1061 = vrot.slane %v1060, 2
    %v1062 = vmax.f32 %v1060, %v1061
    %v1063 = vrot.slane %v1062, 1
    %v1064 = vmax.f32 %v1062, %v1063
    %v1065 = vsel %vm1043, %v1038, -inf
    %v1066 = vrot.slane %v1065, 4
    %v1067 = vmax.f32 %v1065, %v1066
    %v1068 = vrot.slane %v1067, 2
    %v1069 = vmax.f32 %v1067, %v1068
    %v1070 = vrot.slane %v1069, 1
    %v1071 = vmax.f32 %v1069, %v1070
    %v1072 = vsel %vm1043, %v1039, -inf
    %v1073 = vrot.slane %v1072, 4
    %v1074 = vmax.f32 %v1072, %v1073
    %v1075 = vrot.slane %v1074, 2
    %v1076 = vmax.f32 %v1074, %v1075
    %v1077 = vrot.slane %v1076, 1
    %v1078 = vmax.f32 %v1076, %v1077
    %v1079 = vsel %vm1043, %v1040, -inf
    %v1080 = vrot.slane %v1079, 4
    %v1081 = vmax.f32 %v1079, %v1080
    %v1082 = vrot.slane %v1081, 2
    %v1083 = vmax.f32 %v1081, %v1082
    %v1084 = vrot.slane %v1083, 1
    %v1085 = vmax.f32 %v1083, %v1084
    %v1086 = vsel %vm1043, %v1041, -inf
    %v1087 = vrot.slane %v1086, 4
    %v1088 = vmax.f32 %v1086, %v1087
    %v1089 = vrot.slane %v1088, 2
    %v1090 = vmax.f32 %v1088, %v1089
    %v1091 = vrot.slane %v1090, 1
    %v1092 = vmax.f32 %v1090, %v1091
    %v1093 = vsel %vm1043, %v1042, -inf
    %v1094 = vrot.slane %v1093, 4
    %v1095 = vmax.f32 %v1093, %v1094
    %v1096 = vrot.slane %v1095, 2
    %v1097 = vmax.f32 %v1095, %v1096
    %v1098 = vrot.slane %v1097, 1
    %v1099 = vmax.f32 %v1097, %v1098
    %v1100 = vsub.f32 %v1035, %v1050
    %v1101 = vsub.f32 %v1036, %v1057
    %v1102 = vsub.f32 %v1037, %v1064
    %v1103 = vsub.f32 %v1038, %v1071
    %v1104 = vsub.f32 %v1039, %v1078
    %v1105 = vsub.f32 %v1040, %v1085
    %v1106 = vsub.f32 %v1041, %v1092
    %v1107 = vsub.f32 %v1042, %v1099
    %v1108 = vmul.f32 %v1100, 1.442695
    %v1109 = vpow.pop %v1108
    %v1110 = vmul.f32 %v1101, 1.442695
    %v1111 = vpow.pop %v1110
    %v1112 = vmul.f32 %v1102, 1.442695
    %v1113 = vpow.pop %v1112
    %v1114 = vmul.f32 %v1103, 1.442695
    %v1115 = vpow.pop %v1114
    %v1116 = vmul.f32 %v1104, 1.442695
    %v1117 = vpow.pop %v1116
    %v1118 = vmul.f32 %v1105, 1.442695
    %v1119 = vpow.pop %v1118
    %v1120 = vmul.f32 %v1106, 1.442695
    %v1121 = vpow.pop %v1120
    %v1122 = vmul.f32 %v1107, 1.442695
    %v1123 = vpow.pop %v1122
    %v1124 = vsel %vm1043, %v1109, 0.0
    %v1125 = vrot.slane %v1124, 4
    %v1126 = vadd.f32 %v1124, %v1125
    %v1127 = vrot.slane %v1126, 2
    %v1128 = vadd.f32 %v1126, %v1127
    %v1129 = vrot.slane %v1128, 1
    %v1130 = vadd.f32 %v1128, %v1129
    %v1131 = vsel %vm1043, %v1111, 0.0
    %v1132 = vrot.slane %v1131, 4
    %v1133 = vadd.f32 %v1131, %v1132
    %v1134 = vrot.slane %v1133, 2
    %v1135 = vadd.f32 %v1133, %v1134
    %v1136 = vrot.slane %v1135, 1
    %v1137 = vadd.f32 %v1135, %v1136
    %v1138 = vsel %vm1043, %v1113, 0.0
    %v1139 = vrot.slane %v1138, 4
    %v1140 = vadd.f32 %v1138, %v1139
    %v1141 = vrot.slane %v1140, 2
    %v1142 = vadd.f32 %v1140, %v1141
    %v1143 = vrot.slane %v1142, 1
    %v1144 = vadd.f32 %v1142, %v1143
    %v1145 = vsel %vm1043, %v1115, 0.0
    %v1146 = vrot.slane %v1145, 4
    %v1147 = vadd.f32 %v1145, %v1146
    %v1148 = vrot.slane %v1147, 2
    %v1149 = vadd.f32 %v1147, %v1148
    %v1150 = vrot.slane %v1149, 1
    %v1151 = vadd.f32 %v1149, %v1150
    %v1152 = vsel %vm1043, %v1117, 0.0
    %v1153 = vrot.slane %v1152, 4
    %v1154 = vadd.f32 %v1152, %v1153
    %v1155 = vrot.slane %v1154, 2
    %v1156 = vadd.f32 %v1154, %v1155
    %v1157 = vrot.slane %v1156, 1
    %v1158 = vadd.f32 %v1156, %v1157
    %v1159 = vsel %vm1043, %v1119, 0.0
    %v1160 = vrot.slane %v1159, 4
    %v1161 = vadd.f32 %v1159, %v1160
    %v1162 = vrot.slane %v1161, 2
    %v1163 = vadd.f32 %v1161, %v1162
    %v1164 = vrot.slane %v1163, 1
    %v1165 = vadd.f32 %v1163, %v1164
    %v1166 = vsel %vm1043, %v1121, 0.0
    %v1167 = vrot.slane %v1166, 4
    %v1168 = vadd.f32 %v1166, %v1167
    %v1169 = vrot.slane %v1168, 2
    %v1170 = vadd.f32 %v1168, %v1169
    %v1171 = vrot.slane %v1170, 1
    %v1172 = vadd.f32 %v1170, %v1171
    %v1173 = vsel %vm1043, %v1123, 0.0
    %v1174 = vrot.slane %v1173, 4
    %v1175 = vadd.f32 %v1173, %v1174
    %v1176 = vrot.slane %v1175, 2
    %v1177 = vadd.f32 %v1175, %v1176
    %v1178 = vrot.slane %v1177, 1
    %v1179 = vadd.f32 %v1177, %v1178
    %v1180 = vrcp.pop %v1130
    %v1181 = vmul.f32 %v1109, %v1180
    %v1182 = vrcp.pop %v1137
    %v1183 = vmul.f32 %v1111, %v1182
    %v1184 = vrcp.pop %v1144
    %v1185 = vmul.f32 %v1113, %v1184
    %v1186 = vrcp.pop %v1151
    %v1187 = vmul.f32 %v1115, %v1186
    %v1188 = vrcp.pop %v1158
    %v1189 = vmul.f32 %v1117, %v1188
    %v1190 = vrcp.pop %v1165
    %v1191 = vmul.f32 %v1119, %v1190
    %v1192 = vrcp.pop %v1172
    %v1193 = vmul.f32 %v1121, %v1192
    %v1194 = vrcp.pop %v1179
    %v1195 = vmul.f32 %v1123, %v1194
    %1197 = vset.pattern.permute.xlu0 0
    %1198 = vperm.xlu0 %1197, %v1181
    %v1199 = vpop.permute.xlu0 %1198
    %1202 = vset.pattern.permute.xlu0 0
    %1203 = vperm.xlu0 %1202, %v1183
    %v1204 = vpop.permute.xlu0 %1203
    %1207 = vset.pattern.permute.xlu0 0
    %1208 = vperm.xlu0 %1207, %v1185
    %v1209 = vpop.permute.xlu0 %1208
    %1212 = vset.pattern.permute.xlu0 0
    %1213 = vperm.xlu0 %1212, %v1187
    %v1214 = vpop.permute.xlu0 %1213
    %1217 = vset.pattern.permute.xlu0 0
    %1218 = vperm.xlu0 %1217, %v1189
    %v1219 = vpop.permute.xlu0 %1218
    %1222 = vset.pattern.permute.xlu0 0
    %1223 = vperm.xlu0 %1222, %v1191
    %v1224 = vpop.permute.xlu0 %1223
    %1227 = vset.pattern.permute.xlu0 0
    %1228 = vperm.xlu0 %1227, %v1193
    %v1229 = vpop.permute.xlu0 %1228
    %1232 = vset.pattern.permute.xlu0 0
    %1233 = vperm.xlu0 %1232, %v1195
    %v1234 = vpop.permute.xlu0 %1233
    %v1236 = vmul.f32 %v1199, %v794
    %v1237 = vmul.f32 %v1204, %v799
    %v1238 = vmul.f32 %v1209, %v804
    %v1239 = vmul.f32 %v1214, %v809
    %v1240 = vmul.f32 %v1219, %v814
    %v1241 = vmul.f32 %v1224, %v819
    %v1242 = vmul.f32 %v1229, %v824
    %v1243 = vmul.f32 %v1234, %v829
    %vm1244 = vcmask 130048
    %v1245 = vsel %vm1244, %v1236, 0.0
    %v1246 = vrot.slane %v1245, 4
    %v1247 = vadd.f32 %v1245, %v1246
    %v1248 = vrot.slane %v1247, 2
    %v1249 = vadd.f32 %v1247, %v1248
    %v1250 = vrot.slane %v1249, 1
    %v1251 = vadd.f32 %v1249, %v1250
    %v1252 = vsel %vm1244, %v1237, 0.0
    %v1253 = vrot.slane %v1252, 4
    %v1254 = vadd.f32 %v1252, %v1253
    %v1255 = vrot.slane %v1254, 2
    %v1256 = vadd.f32 %v1254, %v1255
    %v1257 = vrot.slane %v1256, 1
    %v1258 = vadd.f32 %v1256, %v1257
    %v1259 = vsel %vm1244, %v1238, 0.0
    %v1260 = vrot.slane %v1259, 4
    %v1261 = vadd.f32 %v1259, %v1260
    %v1262 = vrot.slane %v1261, 2
    %v1263 = vadd.f32 %v1261, %v1262
    %v1264 = vrot.slane %v1263, 1
    %v1265 = vadd.f32 %v1263, %v1264
    %v1266 = vsel %vm1244, %v1239, 0.0
    %v1267 = vrot.slane %v1266, 4
    %v1268 = vadd.f32 %v1266, %v1267
    %v1269 = vrot.slane %v1268, 2
    %v1270 = vadd.f32 %v1268, %v1269
    %v1271 = vrot.slane %v1270, 1
    %v1272 = vadd.f32 %v1270, %v1271
    %v1273 = vsel %vm1244, %v1240, 0.0
    %v1274 = vrot.slane %v1273, 4
    %v1275 = vadd.f32 %v1273, %v1274
    %v1276 = vrot.slane %v1275, 2
    %v1277 = vadd.f32 %v1275, %v1276
    %v1278 = vrot.slane %v1277, 1
    %v1279 = vadd.f32 %v1277, %v1278
    %v1280 = vsel %vm1244, %v1241, 0.0
    %v1281 = vrot.slane %v1280, 4
    %v1282 = vadd.f32 %v1280, %v1281
    %v1283 = vrot.slane %v1282, 2
    %v1284 = vadd.f32 %v1282, %v1283
    %v1285 = vrot.slane %v1284, 1
    %v1286 = vadd.f32 %v1284, %v1285
    %v1287 = vsel %vm1244, %v1242, 0.0
    %v1288 = vrot.slane %v1287, 4
    %v1289 = vadd.f32 %v1287, %v1288
    %v1290 = vrot.slane %v1289, 2
    %v1291 = vadd.f32 %v1289, %v1290
    %v1292 = vrot.slane %v1291, 1
    %v1293 = vadd.f32 %v1291, %v1292
    %v1294 = vsel %vm1244, %v1243, 0.0
    %v1295 = vrot.slane %v1294, 4
    %v1296 = vadd.f32 %v1294, %v1295
    %v1297 = vrot.slane %v1296, 2
    %v1298 = vadd.f32 %v1296, %v1297
    %v1299 = vrot.slane %v1298, 1
    %v1300 = vadd.f32 %v1298, %v1299
    %v1301 = vld [vmem:[%s15] sm:$0xff]
    %v1302 = vld [vmem:[%s15 + $0x8] sm:$0xff]
    %v1303 = vld [vmem:[%s16] sm:$0x1]
    %v1305 = vlaneseq
    %v1306 = vshrl.u32 %v1305, 7
    %v1307 = vsub.s32 0, %v1306
    %v1308 = vrot.slane %v1303, %v1307
    %vm1318 = vcmask 1041409
    %v1319 = vsel %vm1318, %v1258, %v1251
    %vm1320 = vcmask 1042434
    %v1321 = vsel %vm1320, %v1265, %v1319
    %vm1322 = vcmask 1043459
    %v1323 = vsel %vm1322, %v1272, %v1321
    %vm1324 = vcmask 1044484
    %v1325 = vsel %vm1324, %v1279, %v1323
    %vm1326 = vcmask 1045509
    %v1327 = vsel %vm1326, %v1286, %v1325
    %vm1328 = vcmask 1046534
    %v1329 = vsel %vm1328, %v1293, %v1327
    %vm1330 = vcmask 1047559
    %v1331 = vsel %vm1330, %v1300, %v1329
    %v1332 = vsel %vm1244, %v1331, 0
    %1334 = vmatprep.subr.mxu0 0.0
    %1335 = vmatpush1.msra.mxu0 %v1301
    %1336 = vmatprep.subr.mxu0 0.0
    %1337 = vmatpush1.msra.mxu0 %v1302
    %1338 = vmatprep.subr.mxu0 0.0
    %1339 = vmatpush1.msra.mxu0 0.0
    %1340 = vmatprep.subr.mxu0 0.0
    %1341 = vmatpush1.msra.mxu0 0.0
    %1342 = vmatprep.subr.mxu0 0.0
    %1343 = vmatpush1.msra.mxu0 0.0
    %1344 = vmatprep.subr.mxu0 0.0
    %1345 = vmatpush1.msra.mxu0 0.0
    %1346 = vmatprep.subr.mxu0 0.0
    %1347 = vmatpush1.msra.mxu0 0.0
    %1348 = vmatprep.subr.mxu0 0.0
    %1349 = vmatpush1.msra.mxu0 0.0
    %1350 = vmatprep.subr.mxu0 0.0
    %1351 = vmatpush1.msra.mxu0 0.0
    %1352 = vmatprep.subr.mxu0 0.0
    %1353 = vmatpush1.msra.mxu0 0.0
    %1354 = vmatprep.subr.mxu0 0.0
    %1355 = vmatpush1.msra.mxu0 0.0
    %1356 = vmatprep.subr.mxu0 0.0
    %1357 = vmatpush1.msra.mxu0 0.0
    %1358 = vmatprep.subr.mxu0 0.0
    %1359 = vmatpush1.msra.mxu0 0.0
    %1360 = vmatprep.subr.mxu0 0.0
    %1361 = vmatpush1.msra.mxu0 0.0
    %1362 = vmatprep.subr.mxu0 0.0
    %1363 = vmatpush1.msra.mxu0 0.0
    %1364 = vmatprep.subr.mxu0 0.0
    %1365 = vmatpush1.msra.mxu0 0.0
    %1366 = vmatprep.subr.mxu0 0.0
    %1367 = vmatpush1.msra.mxu0 0.0
    %1368 = vmatprep.subr.mxu0 0.0
    %1369 = vmatpush1.msra.mxu0 0.0
    %1370 = vmatprep.subr.mxu0 0.0
    %1371 = vmatpush1.msra.mxu0 0.0
    %1372 = vmatprep.subr.mxu0 0.0
    %1373 = vmatpush1.msra.mxu0 0.0
    %1374 = vmatprep.subr.mxu0 0.0
    %1375 = vmatpush1.msra.mxu0 0.0
    %1376 = vmatprep.subr.mxu0 0.0
    %1377 = vmatpush1.msra.mxu0 0.0
    %1378 = vmatprep.subr.mxu0 0.0
    %1379 = vmatpush1.msra.mxu0 0.0
    %1380 = vmatprep.subr.mxu0 0.0
    %1381 = vmatpush1.msra.mxu0 0.0
    %1382 = vmatprep.subr.mxu0 0.0
    %1383 = vmatpush1.msra.mxu0 0.0
    %1384 = vmatprep.subr.mxu0 0.0
    %1385 = vmatpush1.msra.mxu0 0.0
    %1386 = vmatprep.subr.mxu0 0.0
    %1387 = vmatpush1.msra.mxu0 0.0
    %1388 = vmatprep.subr.mxu0 0.0
    %1389 = vmatpush1.msra.mxu0 0.0
    %1390 = vmatprep.subr.mxu0 0.0
    %1391 = vmatpush1.msra.mxu0 0.0
    %1392 = vmatprep.subr.mxu0 0.0
    %1393 = vmatpush1.msra.mxu0 0.0
    %1394 = vmatprep.subr.mxu0 0.0
    %1395 = vmatpush1.msra.mxu0 0.0
    %1396 = vmatprep.subr.mxu0 0.0
    %1397 = vmatpush1.msra.mxu0 0.0
    %1398 = vmatprep.mubr.f32.mxu0 0.0
    %1399 = vmatmul.mubr.f32.gmra.mrb[0].mxu0 %v1332
    %v1400 = vpop.f32.mrb[0].mxu0
    %v1401 = vadd.f32 %v1308, %v1400
    %v1402 = vpop.f32.mrb[0].mxu0
    %1403 = vdwg.mxu0
    %1404 = vst [vmem:[#allocation3] sm:$0xff] %v1401
    // Predicated region
    $region70: #{tpu_custom_call.1} parent=1 // pred_check
      _
    $region71: #{tpu_custom_call.1} parent=1 // pred_check_branch
      %1406 = sbr.rel (0) target = $region73
    $region72: #{tpu_custom_call.1} parent=1 // pred_region
      %s1408 = ssub.s32 128, 128
      %1409 = vsyncadd [#allocation4], %s1408
      %s1411 = sshll.u32 [#allocation3], 4
      %s1412 = int_to_ptr.vmem [resolvable:$true] %s1411
      %1414 = dma.vmem_to_hbm [thread:$0]  %s1412, 128, %s17, [#allocation4]
    $region73: #{tpu_custom_call.1} parent=1 // pred_fallthru
      _
    // Predicated region
    $region74: #{tpu_custom_call.1} parent=1 // pred_check
      _
    $region75: #{tpu_custom_call.1} parent=1 // pred_check_branch
      %1416 = sbr.rel (0) target = $region77
    $region76: #{tpu_custom_call.1} parent=1 // pred_region
      %1417 = dma.done [#allocation4], 128
    $region77: #{tpu_custom_call.1} parent=1 // pred_fallthru
      _
    %1418 = vsyncpa [#allocation4], 1

</llo_original>
